<compile_context>
chip_gen: v6e
topology: v6e:2x2x1
jax: 0.10.0
libtpu: 0.0.40
codegen_flags: <defaults>
</compile_context>

<pallas_src>
import math

import jax
import jax.numpy as jnp
from jax.experimental import pallas as pl
from jax.experimental.pallas import tpu as pltpu

BN_EPS = 1e-5                 # torch.nn.BatchNorm2d default
LANE = 128                    # TPU lane width
VMEM_LIMIT = 32 * 1024 * 1024


def _round_up(x, m):
    return (x + m - 1) // m * m


def _pad2d(x, rows, cols):
    return jnp.pad(x, ((0, rows - x.shape[0]), (0, cols - x.shape[1])))


# ----------------------------- Pallas kernels ------------------------------

def _gemm_stats_kernel(a_ref, w_ref, y_ref, stats_ref, acc_ref):
    """Tiled GEMM (bf16 in, f32 accum) + per-column partial sum / sum-of-squares."""
    k = pl.program_id(1)

    @pl.when(k == 0)
    def _():
        acc_ref[...] = jnp.zeros_like(acc_ref)

    acc_ref[...] += jnp.dot(a_ref[...], w_ref[...],
                            preferred_element_type=jnp.float32)

    @pl.when(k == pl.num_programs(1) - 1)
    def _():
        y = acc_ref[...]
        y_ref[...] = y
        s = jnp.sum(y, axis=0, keepdims=True)          # (1, N)
        ss = jnp.sum(y * y, axis=0, keepdims=True)     # (1, N)
        stats_ref[0] = jnp.concatenate([s, ss], axis=0)  # (2, N)


def _gemm_tanh_kernel(a_ref, w_ref, y_ref, acc_ref):
    """Tiled GEMM (bf16 in, f32 accum) with fused Tanh epilogue."""
    k = pl.program_id(1)

    @pl.when(k == 0)
    def _():
        acc_ref[...] = jnp.zeros_like(acc_ref)

    acc_ref[...] += jnp.dot(a_ref[...], w_ref[...],
                            preferred_element_type=jnp.float32)

    @pl.when(k == pl.num_programs(1) - 1)
    def _():
        y_ref[...] = jnp.tanh(acc_ref[...]).astype(y_ref.dtype)


def _bn_relu_kernel(y_ref, scale_ref, shift_ref, o_ref):
    """Elementwise BatchNorm apply (precomputed per-channel scale/shift) + ReLU."""
    y = y_ref[...]
    o = jnp.maximum(y * scale_ref[...] + shift_ref[...], 0.0)
    o_ref[...] = o.astype(o_ref.dtype)


# --------------------------- Pallas call wrappers ---------------------------

def _gemm_tiles(M, K, N, out_bytes):
    """Pick (TM, TK) so the double-buffered working set stays well under the
    scoped VMEM limit (sized for v7x's smaller 64 MiB VMEM)."""
    TK = min(_round_up(K, 128), 512)
    TM = min(_round_up(M, 8), 256)
    budget = 24 * 1024 * 1024

    def usage(tm, tk):
        return (tm * N * 4                  # f32 accumulator scratch
                + 2 * tm * tk * 2           # double-buffered bf16 A tile
                + 2 * tk * N * 2            # double-buffered bf16 W tile
                + 2 * tm * N * out_bytes    # double-buffered output tile
                + 4 * N * 4)                # stats tile

    while usage(TM, TK) > budget and TM > 8:
        TM //= 2
    while usage(TM, TK) > budget and TK > 128:
        TK //= 2
    return max(TM, 8), max(TK, 128)


def gemm_bn_stats(a, w):
    """y = a @ w with fused per-column partial stats.

    Returns (y[Mp, N] f32, stats[nm, 2, N] f32); rows [M:Mp] of a are zero-padded
    so they contribute 0 to the stats sums (divide by the real count outside)."""
    M, K = a.shape
    Kw, N = w.shape
    assert K == Kw and N % LANE == 0
    TM, TK = _gemm_tiles(M, K, N, out_bytes=4)
    Mp, Kp = _round_up(M, TM), _round_up(K, TK)
    a = _pad2d(a.astype(jnp.bfloat16), Mp, Kp)
    w = _pad2d(w.astype(jnp.bfloat16), Kp, N)
    nm, nk = Mp // TM, Kp // TK
    y, stats = pl.pallas_call(
        _gemm_stats_kernel,
        out_shape=(jax.ShapeDtypeStruct((Mp, N), jnp.float32),
                   jax.ShapeDtypeStruct((nm, 2, N), jnp.float32)),
        grid=(nm, nk),
        in_specs=[pl.BlockSpec((TM, TK), lambda i, k: (i, k)),
                  pl.BlockSpec((TK, N), lambda i, k: (k, 0))],
        out_specs=(pl.BlockSpec((TM, N), lambda i, k: (i, 0)),
                   pl.BlockSpec((1, 2, N), lambda i, k: (i, 0, 0))),
        scratch_shapes=[pltpu.VMEM((TM, N), jnp.float32)],
        compiler_params=pltpu.CompilerParams(
            dimension_semantics=("parallel", "arbitrary"),
            vmem_limit_bytes=VMEM_LIMIT),
    )(a, w)
    return y, stats


def gemm_tanh(a, w):
    """y = tanh(a @ w) with the same tiled/pipelined structure."""
    M, K = a.shape
    Kw, N = w.shape
    assert K == Kw and N % LANE == 0
    TM, TK = _gemm_tiles(M, K, N, out_bytes=4)
    Mp, Kp = _round_up(M, TM), _round_up(K, TK)
    a = _pad2d(a.astype(jnp.bfloat16), Mp, Kp)
    w = _pad2d(w.astype(jnp.bfloat16), Kp, N)
    nm, nk = Mp // TM, Kp // TK
    return pl.pallas_call(
        _gemm_tanh_kernel,
        out_shape=jax.ShapeDtypeStruct((Mp, N), jnp.float32),
        grid=(nm, nk),
        in_specs=[pl.BlockSpec((TM, TK), lambda i, k: (i, k)),
                  pl.BlockSpec((TK, N), lambda i, k: (k, 0))],
        out_specs=pl.BlockSpec((TM, N), lambda i, k: (i, 0)),
        scratch_shapes=[pltpu.VMEM((TM, N), jnp.float32)],
        compiler_params=pltpu.CompilerParams(
            dimension_semantics=("parallel", "arbitrary"),
            vmem_limit_bytes=VMEM_LIMIT),
    )(a, w)


def bn_relu_apply(y, scale, shift, out_dtype=jnp.bfloat16):
    """o = relu(y * scale + shift), tiled over rows (per-channel scale/shift)."""
    M, N = y.shape
    assert N % LANE == 0
    TM = min(_round_up(M, 8), 512)
    Mp = _round_up(M, TM)
    y = jnp.pad(y, ((0, Mp - M), (0, 0)))
    nm = Mp // TM
    scale2 = scale.reshape(1, N).astype(jnp.float32)
    shift2 = shift.reshape(1, N).astype(jnp.float32)
    out = pl.pallas_call(
        _bn_relu_kernel,
        out_shape=jax.ShapeDtypeStruct((Mp, N), out_dtype),
        grid=(nm,),
        in_specs=[pl.BlockSpec((TM, N), lambda i: (i, 0)),
                  pl.BlockSpec((1, N), lambda i: (0, 0)),
                  pl.BlockSpec((1, N), lambda i: (0, 0))],
        out_specs=pl.BlockSpec((TM, N), lambda i: (i, 0)),
        compiler_params=pltpu.CompilerParams(
            dimension_semantics=("parallel",),
            vmem_limit_bytes=VMEM_LIMIT),
    )(y, scale2, shift2)
    return out[:M]


# -------------------- plain-JAX layout glue (phase split) -------------------

def _bn_scale_shift(stats_sum, count, gamma, beta, OCp):
    """Global BatchNorm stats -> per-channel scale/shift (biased variance)."""
    mean = stats_sum[0] / count
    var = jnp.maximum(stats_sum[1] / count - mean * mean, 0.0)
    OC = gamma.shape[0]
    gamma_p = jnp.pad(gamma.astype(jnp.float32), (0, OCp - OC), constant_values=1.0)
    beta_p = jnp.pad(beta.astype(jnp.float32), (0, OCp - OC))
    scale = gamma_p * jax.lax.rsqrt(var + BN_EPS)
    shift = beta_p - mean * scale
    return scale, shift


def _phase_weight(W, rh, rw, ICp, OCp):
    """PyTorch ConvTranspose2d weight (IC, OC, 4, 4) -> (4*ICp, OCp) GEMM weight
    for output sub-pixel phase (rh, rw) of a stride-2, pad-1 transposed conv."""
    IC, OC = W.shape[0], W.shape[1]
    taps = []
    for dh in (0, 1):
        for dw in (0, 1):
            kh = (3 - rh) - 2 * dh
            kw = (3 - rw) - 2 * dw
            t = jnp.pad(W[:, :, kh, kw], ((0, ICp - IC), (0, OCp - OC)))
            taps.append(t)
    return jnp.concatenate(taps, axis=0)


def _phase_patches(xp, rh, rw, H, Wd):
    """2x2-tap patches for phase (rh, rw); xp is the input padded by 1 spatially."""
    B = xp.shape[0]
    cols = []
    for dh in (0, 1):
        for dw in (0, 1):
            cols.append(xp[:, rh + dh:rh + dh + H, rw + dw:rw + dw + Wd, :])
    return jnp.concatenate(cols, axis=-1).reshape(B * H * Wd, -1)


def _assemble_phases(phase_outs, B, H, Wd, C):
    """out[b, 2q+rh, 2p+rw, c] = phase_outs[rh*2+rw][b, q, p, c]."""
    ph = jnp.stack(phase_outs, axis=0).reshape(2, 2, B, H, Wd, C)
    return jnp.transpose(ph, (2, 3, 0, 4, 1, 5)).reshape(B, 2 * H, 2 * Wd, C)


def convt_first_bn_relu(z, W, gamma, beta):
    """First layer: ConvTranspose2d(zdim, OC, 4, 1, 0) on a 1x1 input, + BN + ReLU.
    Equivalent to a single (B, IC) @ (IC, 16*OC) GEMM producing the 4x4 map."""
    B, IC = z.shape
    OC, K = W.shape[1], W.shape[2]
    ICp, OCp = _round_up(IC, LANE), _round_up(OC, LANE)
    wmat = jnp.transpose(W, (0, 2, 3, 1))                        # (IC, K, K, OC)
    wmat = jnp.pad(wmat, ((0, ICp - IC), (0, 0), (0, 0), (0, OCp - OC)))
    wmat = wmat.reshape(ICp, K * K * OCp)
    zp = jnp.pad(z.astype(jnp.float32), ((0, 0), (0, ICp - IC)))
    y, st = gemm_bn_stats(zp, wmat)                              # (Mp, K*K*OCp)
    # per-channel stats: fold the K*K spatial positions back into the row count
    stats = jnp.sum(st, axis=0).reshape(2, K * K, OCp).sum(axis=1)
    scale, shift = _bn_scale_shift(stats, B * K * K, gamma, beta, OCp)
    a = bn_relu_apply(y.reshape(-1, OCp), scale, shift)[:B * K * K]
    return a.reshape(B, K, K, OCp)


def convt2x_bn_relu(x, W, gamma, beta):
    """ConvTranspose2d(IC, OC, 4, 2, 1) + BN + ReLU via 4 phase GEMMs.
    x: (B, H, W, ICp) bf16 with channels zero-padded to ICp."""
    B, H, Wd, ICp = x.shape
    OC = W.shape[1]
    OCp = _round_up(OC, LANE)
    xp = jnp.pad(x, ((0, 0), (1, 1), (1, 1), (0, 0)))
    M = B * H * Wd
    ys, stats_sum = [], None
    for rh in (0, 1):
        for rw in (0, 1):
            patches = _phase_patches(xp, rh, rw, H, Wd)
            wmat = _phase_weight(W, rh, rw, ICp, OCp)
            y, st = gemm_bn_stats(patches, wmat)
            ys.append(y)
            s = jnp.sum(st, axis=0)
            stats_sum = s if stats_sum is None else stats_sum + s
    scale, shift = _bn_scale_shift(stats_sum, 4 * M, gamma, beta, OCp)
    outs = [bn_relu_apply(y, scale, shift)[:M].reshape(B, H, Wd, OCp) for y in ys]
    return _assemble_phases(outs, B, H, Wd, OCp)


def convt2x_tanh(x, W):
    """Final ConvTranspose2d(IC, nc, 4, 2, 1) + Tanh via 4 phase GEMMs."""
    B, H, Wd, ICp = x.shape
    OC = W.shape[1]
    OCp = _round_up(OC, LANE)
    xp = jnp.pad(x, ((0, 0), (1, 1), (1, 1), (0, 0)))
    M = B * H * Wd
    outs = []
    for rh in (0, 1):
        for rw in (0, 1):
            patches = _phase_patches(xp, rh, rw, H, Wd)
            wmat = _phase_weight(W, rh, rw, ICp, OCp)
            y = gemm_tanh(patches, wmat)
            outs.append(y[:M].reshape(B, H, Wd, OCp))
    full = _assemble_phases(outs, B, H, Wd, OCp)
    return full[..., :OC]


# ----------------------------- model definition -----------------------------

def _isbase2(x):
    y = math.log2(x)
    return y - y // 1 == 0


def init_generator_params(key, settings):
    """Deterministic synthetic init matching the shapes of GeneratorArchitecture."""
    zdim = settings['zdim']
    nf = settings['nfeatures']
    nc = settings['nchannels']
    imsize = settings['image_size']
    if not _isbase2(imsize):
        raise Exception(f'Invalid image size for DCGAN generator: {imsize}')
    p = int(math.log2(imsize))
    mult = 2 ** (p - 2)
    hidden = []
    for i in range(p - 2):
        s = 1 if i == 0 else 2
        pad = 0 if i == 0 else 1
        dim = zdim if i == 0 else int(nf * mult)
        out = int(nf * mult / 2)
        key, sub = jax.random.split(key)
        W = 0.05 * jax.random.normal(sub, (dim, out, 4, 4), jnp.float32)  # (IC, OC, K, K)
        hidden.append(dict(W=W,
                           gamma=jnp.ones((out,), jnp.float32),
                           beta=jnp.zeros((out,), jnp.float32),
                           stride=s, pad=pad))
        mult //= 2
    key, sub = jax.random.split(key)
    Wf = 0.05 * jax.random.normal(sub, (int(nf * mult), nc, 4, 4), jnp.float32)
    return dict(hidden=hidden, final=dict(W=Wf, stride=2, pad=1))


def generator_forward(x_nchw, params):
    """Forward pass of GeneratorArchitecture. x_nchw: (B, zdim, 1, 1) -> NCHW image."""
    B = x_nchw.shape[0]
    hidden = params['hidden']
    if hidden:
        l0 = hidden[0]
        assert l0['stride'] == 1 and l0['pad'] == 0
        z = x_nchw.reshape(B, -1).astype(jnp.float32)
        x = convt_first_bn_relu(z, l0['W'], l0['gamma'], l0['beta'])
        rest = hidden[1:]
    else:
        zdim = x_nchw.shape[1]
        ICp = _round_up(zdim, LANE)
        x = jnp.pad(x_nchw.reshape(B, 1, 1, zdim).astype(jnp.bfloat16),
                    ((0, 0), (0, 0), (0, 0), (0, ICp - zdim)))
        rest = []
    for layer in rest:
        assert layer['stride'] == 2 and layer['pad'] == 1
        x = convt2x_bn_relu(x, layer['W'], layer['gamma'], layer['beta'])
    fl = params['final']
    y = convt2x_tanh(x, fl['W'])                 # (B, imsize, imsize, nc) f32
    return jnp.transpose(y, (0, 3, 1, 2))        # NHWC -> NCHW


# --------------------------- pure-JAX reference ------------------------------

def _ref_conv_transpose(x, W, stride, pad):
    # x: (B, IC, H, W); W: (IC, OC, K, K) PyTorch ConvTranspose2d layout
    k = W.shape[2]
    Wt = jnp.transpose(jnp.flip(W, axis=(2, 3)), (1, 0, 2, 3))   # (OC, IC, K, K)
    pp = k - 1 - pad
    return jax.lax.conv_general_dilated(
        x, Wt, window_strides=(1, 1), padding=[(pp, pp), (pp, pp)],
        lhs_dilation=(stride, stride),
        dimension_numbers=('NCHW', 'OIHW', 'NCHW'))


def _ref_bn_relu(y, gamma, beta):
    mean = jnp.mean(y, axis=(0, 2, 3), keepdims=True)
    var = jnp.mean((y - mean) ** 2, axis=(0, 2, 3), keepdims=True)
    yn = (y - mean) * jax.lax.rsqrt(var + BN_EPS)
    yn = yn * gamma.reshape(1, -1, 1, 1) + beta.reshape(1, -1, 1, 1)
    return jnp.maximum(yn, 0.0)


def reference_forward(x_nchw, params):
    h = x_nchw.astype(jnp.float32)
    for layer in params['hidden']:
        h = _ref_conv_transpose(h, layer['W'], layer['stride'], layer['pad'])
        h = _ref_bn_relu(h, layer['gamma'], layer['beta'])
    fl = params['final']
    h = _ref_conv_transpose(h, fl['W'], fl['stride'], fl['pad'])
    return jnp.tanh(h)


# ---------------------------------- main ------------------------------------

if __name__ == "__main__":
    settings = dict(zdim=8, nfeatures=8, nchannels=3, image_size=16)
    key = jax.random.PRNGKey(0)
    key, pkey, xkey = jax.random.split(key, 3)
    params = init_generator_params(pkey, settings)
    # DCGAN generator input: latent noise (B, zdim, 1, 1), NCHW
    x = jax.random.normal(xkey, (2, settings['zdim'], 1, 1), jnp.float32)

    out = jax.block_until_ready(generator_forward(x, params))
    assert out.shape == (2, settings['nchannels'],
                         settings['image_size'], settings['image_size'])
    assert bool(jnp.all(jnp.isfinite(out)))
    assert bool(jnp.all(jnp.abs(out) <= 1.0))  # tanh range

    # correctness vs a pure-JAX (f32) reference of the PyTorch module semantics
    ref = jax.block_until_ready(reference_forward(x, params))
    err = float(jnp.max(jnp.abs(out - ref)))
    assert err < 0.1, f"max abs error vs reference too large: {err}"

    print("KERNEL_OK")
</pallas_src>

<mosaic_0001>
module attributes {stable_mosaic.version = 11 : i64} {
  func.func @_gemm_stats_kernel(%arg0: i32, %arg1: i32, %arg2: memref<8x128xbf16, #tpu.memory_space<vmem>>, %arg3: memref<128x2048xbf16, #tpu.memory_space<vmem>>, %arg4: memref<8x2048xf32, #tpu.memory_space<vmem>>, %arg5: memref<1x2x2048xf32, #tpu.memory_space<vmem>>, %arg6: memref<8x2048xf32, #tpu.memory_space<vmem>>) attributes {dimension_semantics = [#tpu.dimension_semantics<parallel>, #tpu.dimension_semantics<arbitrary>], iteration_bounds = array<i64: 1, 1>, scalar_prefetch = 0 : i64, scratch_operands = 1 : i64, tpu.core_type = #tpu.core_type<tc>, window_params = [{transform_indices = @transform_0, window_bounds = array<i64: 8, 128>}, {transform_indices = @transform_1, window_bounds = array<i64: 128, 2048>}, {transform_indices = @transform_2, window_bounds = array<i64: 8, 2048>}, {transform_indices = @transform_3, window_bounds = array<i64: 1, 2, 2048>}]} {
    %c0_i32 = arith.constant 0 : i32
    %0 = arith.cmpi eq, %arg1, %c0_i32 : i32
    %1 = arith.extui %0 : i1 to i32
    %c0_i32_0 = arith.constant 0 : i32
    %2 = arith.cmpi ne, %1, %c0_i32_0 : i32
    scf.if %2 {
      %cst_10 = arith.constant 0.000000e+00 : f32
      %12 = vector.broadcast %cst_10 : f32 to vector<8x2048xf32>
      %c0_11 = arith.constant 0 : index
      %c0_12 = arith.constant 0 : index
      %13 = vector.load %arg6[%c0_11, %c0_12] : memref<8x2048xf32, #tpu.memory_space<vmem>>, vector<8x2048xf32>
      tpu.vector_store %arg6[%c0_11, %c0_12], %12 {strides = array<i32>} : memref<8x2048xf32, #tpu.memory_space<vmem>>, vector<8x2048xf32>,
    } else {
    }
    %c0 = arith.constant 0 : index
    %c0_1 = arith.constant 0 : index
    %3 = vector.load %arg6[%c0, %c0_1] : memref<8x2048xf32, #tpu.memory_space<vmem>>, vector<8x2048xf32>
    %c0_2 = arith.constant 0 : index
    %c0_3 = arith.constant 0 : index
    %4 = vector.load %arg2[%c0_2, %c0_3] : memref<8x128xbf16, #tpu.memory_space<vmem>>, vector<8x128xbf16>
    %c0_4 = arith.constant 0 : index
    %c0_5 = arith.constant 0 : index
    %5 = vector.load %arg3[%c0_4, %c0_5] : memref<128x2048xbf16, #tpu.memory_space<vmem>>, vector<128x2048xbf16>
    %cst = arith.constant dense<0.000000e+00> : vector<8x2048xf32>
    %6 = tpu.matmul %4, %5, %cst {dimension_numbers = #tpu.dot_dimension_numbers<[1], [0], [0], [1], [0, 0, 1, 1], [], []>} : vector<8x128xbf16>, vector<128x2048xbf16>, vector<8x2048xf32> -> vector<8x2048xf32>
    %7 = arith.addf %3, %6 : vector<8x2048xf32>
    %c0_6 = arith.constant 0 : index
    %c0_7 = arith.constant 0 : index
    %8 = vector.load %arg6[%c0_6, %c0_7] : memref<8x2048xf32, #tpu.memory_space<vmem>>, vector<8x2048xf32>
    tpu.vector_store %arg6[%c0_6, %c0_7], %7 {strides = array<i32>} : memref<8x2048xf32, #tpu.memory_space<vmem>>, vector<8x2048xf32>,
    %c0_i32_8 = arith.constant 0 : i32
    %9 = arith.cmpi eq, %arg1, %c0_i32_8 : i32
    %10 = arith.extui %9 : i1 to i32
    %c0_i32_9 = arith.constant 0 : i32
    %11 = arith.cmpi ne, %10, %c0_i32_9 : i32
    scf.if %11 {
      %c0_10 = arith.constant 0 : index
      %c0_11 = arith.constant 0 : index
      %12 = vector.load %arg6[%c0_10, %c0_11] : memref<8x2048xf32, #tpu.memory_space<vmem>>, vector<8x2048xf32>
      %c0_12 = arith.constant 0 : index
      %c0_13 = arith.constant 0 : index
      %13 = vector.load %arg4[%c0_12, %c0_13] : memref<8x2048xf32, #tpu.memory_space<vmem>>, vector<8x2048xf32>
      tpu.vector_store %arg4[%c0_12, %c0_13], %12 {strides = array<i32>} : memref<8x2048xf32, #tpu.memory_space<vmem>>, vector<8x2048xf32>,
      %cst_14 = arith.constant dense<0.000000e+00> : vector<2048xf32>
      %14 = vector.multi_reduction <add>, %12, %cst_14 [0] : vector<8x2048xf32> to vector<2048xf32>
      %15 = vector.shape_cast %14 : vector<2048xf32> to vector<1x2048xf32>
      %16 = arith.mulf %12, %12 : vector<8x2048xf32>
      %cst_15 = arith.constant dense<0.000000e+00> : vector<2048xf32>
      %17 = vector.multi_reduction <add>, %16, %cst_15 [0] : vector<8x2048xf32> to vector<2048xf32>
      %18 = vector.shape_cast %17 : vector<2048xf32> to vector<1x2048xf32>
      %19 = tpu.concatenate %15, %18 in 0 : vector<1x2048xf32>, vector<1x2048xf32> -> vector<2x2048xf32>
      %c0_16 = arith.constant 0 : index
      %c0_17 = arith.constant 0 : index
      %c0_18 = arith.constant 0 : index
      %20 = vector.load %arg5[%c0_16, %c0_17, %c0_18] : memref<1x2x2048xf32, #tpu.memory_space<vmem>>, vector<1x2x2048xf32>
      %21 = vector.shape_cast %20 : vector<1x2x2048xf32> to vector<2x2048xf32>
      %22 = vector.shape_cast %19 : vector<2x2048xf32> to vector<1x2x2048xf32>
      tpu.vector_store %arg5[%c0_16, %c0_17, %c0_18], %22 {strides = array<i32>} : memref<1x2x2048xf32, #tpu.memory_space<vmem>>, vector<1x2x2048xf32>,
    } else {
    }
    return
  }
  func.func @transform_0(%arg0: i32, %arg1: i32) -> (i32, i32) {
    %c0_i32 = arith.constant 0 : i32
    return %arg0, %arg1 : i32, i32
  }
  func.func @transform_1(%arg0: i32, %arg1: i32) -> (i32, i32) {
    %c0_i32 = arith.constant 0 : i32
    %c0_i32_0 = arith.constant 0 : i32
    return %arg1, %c0_i32 : i32, i32
  }
  func.func @transform_2(%arg0: i32, %arg1: i32) -> (i32, i32) {
    %c0_i32 = arith.constant 0 : i32
    %c0_i32_0 = arith.constant 0 : i32
    return %arg0, %c0_i32 : i32, i32
  }
  func.func @transform_3(%arg0: i32, %arg1: i32) -> (i32, i32, i32) {
    %c0_i32 = arith.constant 0 : i32
    %c0_i32_0 = arith.constant 0 : i32
    %c0_i32_1 = arith.constant 0 : i32
    return %arg0, %c0_i32, %c0_i32_0 : i32, i32, i32
  }
}

</mosaic_0001>

<llo_original>
// kernel: tpu_custom_call.1
$region0: #{tpu_custom_call.1}
  #allocation0 [shape = 'u32[]', space=smem, size = 0x4, offset = 0x4, fixed_abs, tag = 'smem constant byte address 0x4 - core index']
  #allocation1 [shape = 'u32[144,128]{1,0:T(1,128)}', space=vmem, size = 0x12000, scoped, tag = 'internal scratch']
  #allocation2 [shape = 'f32[8,2048]{1,0:T(8,128)}', space=vmem, size = 0x10000, scoped, tag = 'scratch operand']
  %s0 = inlined_call_operand.hbm [shape: bf16[8,128], index: 0, kind: input, shape index: {}]
  %s1 = inlined_call_operand.hbm [shape: bf16[128,2048], index: 1, kind: input, shape index: {}]
  %s2 = inlined_call_operand.hbm [shape: f32[8,2048], index: 2, kind: output, shape index: {0}]
  %s3 = inlined_call_operand.hbm [shape: f32[1,2,2048], index: 3, kind: output, shape index: {1}]
  %4 = xla_tuple %s2, %s3
  %s5 = sld [smem:[#allocation0]]
  $region42: #{tpu_custom_call.1} parent=0
    _
  %s7 = ssub.s32 1, %s5
  %s8 = scalar_select 0, %s7, %s5
  $region1: #{tpu_custom_call.1} parent=0
    #allocation3 [shape = 'u8[2048]{0}', space=vmem, size = 0x800, scoped, tag = 'input window, operand 0, single buffered']
    #allocation4 [shape = 's32[1]{0}', space=sflag, size = 0x4, scoped, tag = 'scoped memory for tpu_custom_call.1']
    #allocation5 [shape = 's32[1]{0}', space=sflag, size = 0x4, scoped, tag = 'scoped memory for tpu_custom_call.1']
    #allocation6 [shape = 'u8[524288]{0}', space=vmem, size = 0x80000, scoped, tag = 'input window, operand 1, single buffered']
    #allocation7 [shape = 's32[1]{0}', space=sflag, size = 0x4, scoped, tag = 'scoped memory for tpu_custom_call.1']
    #allocation8 [shape = 'u8[65536]{0}', space=vmem, size = 0x10000, scoped, tag = 'output window, operand 0, single buffered']
    #allocation9 [shape = 'u8[16384]{0}', space=vmem, size = 0x4000, scoped, tag = 'output window, operand 1, single buffered']
    #allocation10 [shape = 's32[1]{0}', space=sflag, size = 0x4, scoped, tag = 'scoped memory for tpu_custom_call.1']
    %9 = vsyncpa [#allocation4], 0
    %10 = vsyncpa [#allocation7], 0
    %11 = vsyncpa [#allocation5], 0
    %12 = vsyncpa [#allocation10], 0
    // Predicated region
    $region2: #{tpu_custom_call.1} parent=1 // pred_check
      _
    $region3: #{tpu_custom_call.1} parent=1 // pred_check_branch
      %14 = sbr.rel (0) target = $region5
    $region4: #{tpu_custom_call.1} parent=1 // pred_region
      %s16 = ssub.s32 64, 64
      %17 = vsyncadd [#allocation4], %s16
      %s19 = sshll.u32 [#allocation3], 4
      %s20 = int_to_ptr.vmem [resolvable:$true] %s19
      %22 = dma.hbm_to_vmem [thread:$0]  %s0, 64, %s20, [#allocation4]
    $region5: #{tpu_custom_call.1} parent=1 // pred_fallthru
      _
    // Predicated region
    $region6: #{tpu_custom_call.1} parent=1 // pred_check
      _
    $region7: #{tpu_custom_call.1} parent=1 // pred_check_branch
      %24 = sbr.rel (0) target = $region9
    $region8: #{tpu_custom_call.1} parent=1 // pred_region
      %s26 = ssub.s32 16384, 16384
      %27 = vsyncadd [#allocation7], %s26
      %s28 = sshll.u32 [#allocation6], 4
      %s29 = int_to_ptr.vmem [resolvable:$true] %s28
      %34 = dma.hbm_to_vmem [thread:$0]  %s1, 16384, %s29, [#allocation7], 1024, 1024, 64
    $region9: #{tpu_custom_call.1} parent=1 // pred_fallthru
      _
    // Predicated region
    $region10: #{tpu_custom_call.1} parent=1 // pred_check
      _
    $region11: #{tpu_custom_call.1} parent=1 // pred_check_branch
      %36 = sbr.rel (0) target = $region13
    $region12: #{tpu_custom_call.1} parent=1 // pred_region
      %37 = dma.done [#allocation4], 64
    $region13: #{tpu_custom_call.1} parent=1 // pred_fallthru
      _
    // Predicated region
    $region14: #{tpu_custom_call.1} parent=1 // pred_check
      _
    $region15: #{tpu_custom_call.1} parent=1 // pred_check_branch
      %39 = sbr.rel (0) target = $region17
    $region16: #{tpu_custom_call.1} parent=1 // pred_region
      %40 = dma.done [#allocation7], 16384
    $region17: #{tpu_custom_call.1} parent=1 // pred_fallthru
      _
    %p42 = scmp.eq.s32.totalorder 0, 0
    // Predicated region
    $region18: #{tpu_custom_call.1} parent=1 // pred_check
      %p43 = pneg %p42
    $region19: #{tpu_custom_call.1} parent=1 // pred_check_branch
      %45 = sbr.rel (%p43) target = $region21
    $region20: #{tpu_custom_call.1} parent=1 // pred_region
      %46 = vst [vmem:[#allocation2] sm:$0xff] 0.0
      %47 = vst [vmem:[#allocation2 + $0x8] sm:$0xff] 0.0
      %48 = vst [vmem:[#allocation2 + $0x10] sm:$0xff] 0.0
      %49 = vst [vmem:[#allocation2 + $0x18] sm:$0xff] 0.0
      %50 = vst [vmem:[#allocation2 + $0x20] sm:$0xff] 0.0
      %51 = vst [vmem:[#allocation2 + $0x28] sm:$0xff] 0.0
      %52 = vst [vmem:[#allocation2 + $0x30] sm:$0xff] 0.0
      %53 = vst [vmem:[#allocation2 + $0x38] sm:$0xff] 0.0
      %54 = vst [vmem:[#allocation2 + $0x40] sm:$0xff] 0.0
      %55 = vst [vmem:[#allocation2 + $0x48] sm:$0xff] 0.0
      %56 = vst [vmem:[#allocation2 + $0x50] sm:$0xff] 0.0
      %57 = vst [vmem:[#allocation2 + $0x58] sm:$0xff] 0.0
      %58 = vst [vmem:[#allocation2 + $0x60] sm:$0xff] 0.0
      %59 = vst [vmem:[#allocation2 + $0x68] sm:$0xff] 0.0
      %60 = vst [vmem:[#allocation2 + $0x70] sm:$0xff] 0.0
      %61 = vst [vmem:[#allocation2 + $0x78] sm:$0xff] 0.0
    $region21: #{tpu_custom_call.1} parent=1 // pred_fallthru
      _
    %v62 = vld [vmem:[#allocation2] sm:$0xff]
    %v63 = vld [vmem:[#allocation2 + $0x8] sm:$0xff]
    %v64 = vld [vmem:[#allocation2 + $0x10] sm:$0xff]
    %v65 = vld [vmem:[#allocation2 + $0x18] sm:$0xff]
    %v66 = vld [vmem:[#allocation2 + $0x20] sm:$0xff]
    %v67 = vld [vmem:[#allocation2 + $0x28] sm:$0xff]
    %v68 = vld [vmem:[#allocation2 + $0x30] sm:$0xff]
    %v69 = vld [vmem:[#allocation2 + $0x38] sm:$0xff]
    %v70 = vld [vmem:[#allocation2 + $0x40] sm:$0xff]
    %v71 = vld [vmem:[#allocation2 + $0x48] sm:$0xff]
    %v72 = vld [vmem:[#allocation2 + $0x50] sm:$0xff]
    %v73 = vld [vmem:[#allocation2 + $0x58] sm:$0xff]
    %v74 = vld [vmem:[#allocation2 + $0x60] sm:$0xff]
    %v75 = vld [vmem:[#allocation2 + $0x68] sm:$0xff]
    %v76 = vld [vmem:[#allocation2 + $0x70] sm:$0xff]
    %v77 = vld [vmem:[#allocation2 + $0x78] sm:$0xff]
    %v78 = vld [vmem:[#allocation3] sm:$0xf]
    %v79 = vld [vmem:[#allocation6] sm:$0xff]
    %v80 = vld [vmem:[#allocation6 + $0x8] sm:$0xff]
    %v81 = vld [vmem:[#allocation6 + $0x10] sm:$0xff]
    %v82 = vld [vmem:[#allocation6 + $0x18] sm:$0xff]
    %v83 = vld [vmem:[#allocation6 + $0x20] sm:$0xff]
    %v84 = vld [vmem:[#allocation6 + $0x28] sm:$0xff]
    %v85 = vld [vmem:[#allocation6 + $0x30] sm:$0xff]
    %v86 = vld [vmem:[#allocation6 + $0x38] sm:$0xff]
    %v87 = vld [vmem:[#allocation6 + $0x40] sm:$0xff]
    %v88 = vld [vmem:[#allocation6 + $0x48] sm:$0xff]
    %v89 = vld [vmem:[#allocation6 + $0x50] sm:$0xff]
    %v90 = vld [vmem:[#allocation6 + $0x58] sm:$0xff]
    %v91 = vld [vmem:[#allocation6 + $0x60] sm:$0xff]
    %v92 = vld [vmem:[#allocation6 + $0x68] sm:$0xff]
    %v93 = vld [vmem:[#allocation6 + $0x70] sm:$0xff]
    %v94 = vld [vmem:[#allocation6 + $0x78] sm:$0xff]
    %v95 = vld [vmem:[#allocation6 + $0x80] sm:$0xff]
    %v96 = vld [vmem:[#allocation6 + $0x88] sm:$0xff]
    %v97 = vld [vmem:[#allocation6 + $0x90] sm:$0xff]
    %v98 = vld [vmem:[#allocation6 + $0x98] sm:$0xff]
    %v99 = vld [vmem:[#allocation6 + $0xa0] sm:$0xff]
    %v100 = vld [vmem:[#allocation6 + $0xa8] sm:$0xff]
    %v101 = vld [vmem:[#allocation6 + $0xb0] sm:$0xff]
    %v102 = vld [vmem:[#allocation6 + $0xb8] sm:$0xff]
    %v103 = vld [vmem:[#allocation6 + $0xc0] sm:$0xff]
    %v104 = vld [vmem:[#allocation6 + $0xc8] sm:$0xff]
    %v105 = vld [vmem:[#allocation6 + $0xd0] sm:$0xff]
    %v106 = vld [vmem:[#allocation6 + $0xd8] sm:$0xff]
    %v107 = vld [vmem:[#allocation6 + $0xe0] sm:$0xff]
    %v108 = vld [vmem:[#allocation6 + $0xe8] sm:$0xff]
    %v109 = vld [vmem:[#allocation6 + $0xf0] sm:$0xff]
    %v110 = vld [vmem:[#allocation6 + $0xf8] sm:$0xff]
    %v111 = vld [vmem:[#allocation6 + $0x100] sm:$0xff]
    %v112 = vld [vmem:[#allocation6 + $0x108] sm:$0xff]
    %v113 = vld [vmem:[#allocation6 + $0x110] sm:$0xff]
    %v114 = vld [vmem:[#allocation6 + $0x118] sm:$0xff]
    %v115 = vld [vmem:[#allocation6 + $0x120] sm:$0xff]
    %v116 = vld [vmem:[#allocation6 + $0x128] sm:$0xff]
    %v117 = vld [vmem:[#allocation6 + $0x130] sm:$0xff]
    %v118 = vld [vmem:[#allocation6 + $0x138] sm:$0xff]
    %v119 = vld [vmem:[#allocation6 + $0x140] sm:$0xff]
    %v120 = vld [vmem:[#allocation6 + $0x148] sm:$0xff]
    %v121 = vld [vmem:[#allocation6 + $0x150] sm:$0xff]
    %v122 = vld [vmem:[#allocation6 + $0x158] sm:$0xff]
    %v123 = vld [vmem:[#allocation6 + $0x160] sm:$0xff]
    %v124 = vld [vmem:[#allocation6 + $0x168] sm:$0xff]
    %v125 = vld [vmem:[#allocation6 + $0x170] sm:$0xff]
    %v126 = vld [vmem:[#allocation6 + $0x178] sm:$0xff]
    %v127 = vld [vmem:[#allocation6 + $0x180] sm:$0xff]
    %v128 = vld [vmem:[#allocation6 + $0x188] sm:$0xff]
    %v129 = vld [vmem:[#allocation6 + $0x190] sm:$0xff]
    %v130 = vld [vmem:[#allocation6 + $0x198] sm:$0xff]
    %v131 = vld [vmem:[#allocation6 + $0x1a0] sm:$0xff]
    %v132 = vld [vmem:[#allocation6 + $0x1a8] sm:$0xff]
    %v133 = vld [vmem:[#allocation6 + $0x1b0] sm:$0xff]
    %v134 = vld [vmem:[#allocation6 + $0x1b8] sm:$0xff]
    %v135 = vld [vmem:[#allocation6 + $0x1c0] sm:$0xff]
    %v136 = vld [vmem:[#allocation6 + $0x1c8] sm:$0xff]
    %v137 = vld [vmem:[#allocation6 + $0x1d0] sm:$0xff]
    %v138 = vld [vmem:[#allocation6 + $0x1d8] sm:$0xff]
    %v139 = vld [vmem:[#allocation6 + $0x1e0] sm:$0xff]
    %v140 = vld [vmem:[#allocation6 + $0x1e8] sm:$0xff]
    %v141 = vld [vmem:[#allocation6 + $0x1f0] sm:$0xff]
    %v142 = vld [vmem:[#allocation6 + $0x1f8] sm:$0xff]
    %v143 = vld [vmem:[#allocation6 + $0x200] sm:$0xff]
    %v144 = vld [vmem:[#allocation6 + $0x208] sm:$0xff]
    %v145 = vld [vmem:[#allocation6 + $0x210] sm:$0xff]
    %v146 = vld [vmem:[#allocation6 + $0x218] sm:$0xff]
    %v147 = vld [vmem:[#allocation6 + $0x220] sm:$0xff]
    %v148 = vld [vmem:[#allocation6 + $0x228] sm:$0xff]
    %v149 = vld [vmem:[#allocation6 + $0x230] sm:$0xff]
    %v150 = vld [vmem:[#allocation6 + $0x238] sm:$0xff]
    %v151 = vld [vmem:[#allocation6 + $0x240] sm:$0xff]
    %v152 = vld [vmem:[#allocation6 + $0x248] sm:$0xff]
    %v153 = vld [vmem:[#allocation6 + $0x250] sm:$0xff]
    %v154 = vld [vmem:[#allocation6 + $0x258] sm:$0xff]
    %v155 = vld [vmem:[#allocation6 + $0x260] sm:$0xff]
    %v156 = vld [vmem:[#allocation6 + $0x268] sm:$0xff]
    %v157 = vld [vmem:[#allocation6 + $0x270] sm:$0xff]
    %v158 = vld [vmem:[#allocation6 + $0x278] sm:$0xff]
    %v159 = vld [vmem:[#allocation6 + $0x280] sm:$0xff]
    %v160 = vld [vmem:[#allocation6 + $0x288] sm:$0xff]
    %v161 = vld [vmem:[#allocation6 + $0x290] sm:$0xff]
    %v162 = vld [vmem:[#allocation6 + $0x298] sm:$0xff]
    %v163 = vld [vmem:[#allocation6 + $0x2a0] sm:$0xff]
    %v164 = vld [vmem:[#allocation6 + $0x2a8] sm:$0xff]
    %v165 = vld [vmem:[#allocation6 + $0x2b0] sm:$0xff]
    %v166 = vld [vmem:[#allocation6 + $0x2b8] sm:$0xff]
    %v167 = vld [vmem:[#allocation6 + $0x2c0] sm:$0xff]
    %v168 = vld [vmem:[#allocation6 + $0x2c8] sm:$0xff]
    %v169 = vld [vmem:[#allocation6 + $0x2d0] sm:$0xff]
    %v170 = vld [vmem:[#allocation6 + $0x2d8] sm:$0xff]
    %v171 = vld [vmem:[#allocation6 + $0x2e0] sm:$0xff]
    %v172 = vld [vmem:[#allocation6 + $0x2e8] sm:$0xff]
    %v173 = vld [vmem:[#allocation6 + $0x2f0] sm:$0xff]
    %v174 = vld [vmem:[#allocation6 + $0x2f8] sm:$0xff]
    %v175 = vld [vmem:[#allocation6 + $0x300] sm:$0xff]
    %v176 = vld [vmem:[#allocation6 + $0x308] sm:$0xff]
    %v177 = vld [vmem:[#allocation6 + $0x310] sm:$0xff]
    %v178 = vld [vmem:[#allocation6 + $0x318] sm:$0xff]
    %v179 = vld [vmem:[#allocation6 + $0x320] sm:$0xff]
    %v180 = vld [vmem:[#allocation6 + $0x328] sm:$0xff]
    %v181 = vld [vmem:[#allocation6 + $0x330] sm:$0xff]
    %v182 = vld [vmem:[#allocation6 + $0x338] sm:$0xff]
    %v183 = vld [vmem:[#allocation6 + $0x340] sm:$0xff]
    %v184 = vld [vmem:[#allocation6 + $0x348] sm:$0xff]
    %v185 = vld [vmem:[#allocation6 + $0x350] sm:$0xff]
    %v186 = vld [vmem:[#allocation6 + $0x358] sm:$0xff]
    %v187 = vld [vmem:[#allocation6 + $0x360] sm:$0xff]
    %v188 = vld [vmem:[#allocation6 + $0x368] sm:$0xff]
    %v189 = vld [vmem:[#allocation6 + $0x370] sm:$0xff]
    %v190 = vld [vmem:[#allocation6 + $0x378] sm:$0xff]
    %v191 = vld [vmem:[#allocation6 + $0x380] sm:$0xff]
    %v192 = vld [vmem:[#allocation6 + $0x388] sm:$0xff]
    %v193 = vld [vmem:[#allocation6 + $0x390] sm:$0xff]
    %v194 = vld [vmem:[#allocation6 + $0x398] sm:$0xff]
    %v195 = vld [vmem:[#allocation6 + $0x3a0] sm:$0xff]
    %v196 = vld [vmem:[#allocation6 + $0x3a8] sm:$0xff]
    %v197 = vld [vmem:[#allocation6 + $0x3b0] sm:$0xff]
    %v198 = vld [vmem:[#allocation6 + $0x3b8] sm:$0xff]
    %v199 = vld [vmem:[#allocation6 + $0x3c0] sm:$0xff]
    %v200 = vld [vmem:[#allocation6 + $0x3c8] sm:$0xff]
    %v201 = vld [vmem:[#allocation6 + $0x3d0] sm:$0xff]
    %v202 = vld [vmem:[#allocation6 + $0x3d8] sm:$0xff]
    %v203 = vld [vmem:[#allocation6 + $0x3e0] sm:$0xff]
    %v204 = vld [vmem:[#allocation6 + $0x3e8] sm:$0xff]
    %v205 = vld [vmem:[#allocation6 + $0x3f0] sm:$0xff]
    %v206 = vld [vmem:[#allocation6 + $0x3f8] sm:$0xff]
    %v335 = vunpack.c.l.b16 %v79
    %v336 = vunpack.c.h.b16 %v79
    %v337 = vunpack.c.l.b16 %v80
    %v338 = vunpack.c.h.b16 %v80
    %v339 = vunpack.c.l.b16 %v81
    %v340 = vunpack.c.h.b16 %v81
    %v341 = vunpack.c.l.b16 %v82
    %v342 = vunpack.c.h.b16 %v82
    %v343 = vunpack.c.l.b16 %v83
    %v344 = vunpack.c.h.b16 %v83
    %v345 = vunpack.c.l.b16 %v84
    %v346 = vunpack.c.h.b16 %v84
    %v347 = vunpack.c.l.b16 %v85
    %v348 = vunpack.c.h.b16 %v85
    %v349 = vunpack.c.l.b16 %v86
    %v350 = vunpack.c.h.b16 %v86
    %v351 = vunpack.c.l.b16 %v87
    %v352 = vunpack.c.h.b16 %v87
    %v353 = vunpack.c.l.b16 %v88
    %v354 = vunpack.c.h.b16 %v88
    %v355 = vunpack.c.l.b16 %v89
    %v356 = vunpack.c.h.b16 %v89
    %v357 = vunpack.c.l.b16 %v90
    %v358 = vunpack.c.h.b16 %v90
    %v359 = vunpack.c.l.b16 %v91
    %v360 = vunpack.c.h.b16 %v91
    %v361 = vunpack.c.l.b16 %v92
    %v362 = vunpack.c.h.b16 %v92
    %v363 = vunpack.c.l.b16 %v93
    %v364 = vunpack.c.h.b16 %v93
    %v365 = vunpack.c.l.b16 %v94
    %v366 = vunpack.c.h.b16 %v94
    %v367 = vunpack.c.l.b16 %v95
    %v368 = vunpack.c.h.b16 %v95
    %v369 = vunpack.c.l.b16 %v96
    %v370 = vunpack.c.h.b16 %v96
    %v371 = vunpack.c.l.b16 %v97
    %v372 = vunpack.c.h.b16 %v97
    %v373 = vunpack.c.l.b16 %v98
    %v374 = vunpack.c.h.b16 %v98
    %v375 = vunpack.c.l.b16 %v99
    %v376 = vunpack.c.h.b16 %v99
    %v377 = vunpack.c.l.b16 %v100
    %v378 = vunpack.c.h.b16 %v100
    %v379 = vunpack.c.l.b16 %v101
    %v380 = vunpack.c.h.b16 %v101
    %v381 = vunpack.c.l.b16 %v102
    %v382 = vunpack.c.h.b16 %v102
    %v383 = vunpack.c.l.b16 %v103
    %v384 = vunpack.c.h.b16 %v103
    %v385 = vunpack.c.l.b16 %v104
    %v386 = vunpack.c.h.b16 %v104
    %v387 = vunpack.c.l.b16 %v105
    %v388 = vunpack.c.h.b16 %v105
    %v389 = vunpack.c.l.b16 %v106
    %v390 = vunpack.c.h.b16 %v106
    %v391 = vunpack.c.l.b16 %v107
    %v392 = vunpack.c.h.b16 %v107
    %v393 = vunpack.c.l.b16 %v108
    %v394 = vunpack.c.h.b16 %v108
    %v395 = vunpack.c.l.b16 %v109
    %v396 = vunpack.c.h.b16 %v109
    %v397 = vunpack.c.l.b16 %v110
    %v398 = vunpack.c.h.b16 %v110
    %v399 = vunpack.c.l.b16 %v111
    %v400 = vunpack.c.h.b16 %v111
    %v401 = vunpack.c.l.b16 %v112
    %v402 = vunpack.c.h.b16 %v112
    %v403 = vunpack.c.l.b16 %v113
    %v404 = vunpack.c.h.b16 %v113
    %v405 = vunpack.c.l.b16 %v114
    %v406 = vunpack.c.h.b16 %v114
    %v407 = vunpack.c.l.b16 %v115
    %v408 = vunpack.c.h.b16 %v115
    %v409 = vunpack.c.l.b16 %v116
    %v410 = vunpack.c.h.b16 %v116
    %v411 = vunpack.c.l.b16 %v117
    %v412 = vunpack.c.h.b16 %v117
    %v413 = vunpack.c.l.b16 %v118
    %v414 = vunpack.c.h.b16 %v118
    %v415 = vunpack.c.l.b16 %v119
    %v416 = vunpack.c.h.b16 %v119
    %v417 = vunpack.c.l.b16 %v120
    %v418 = vunpack.c.h.b16 %v120
    %v419 = vunpack.c.l.b16 %v121
    %v420 = vunpack.c.h.b16 %v121
    %v421 = vunpack.c.l.b16 %v122
    %v422 = vunpack.c.h.b16 %v122
    %v423 = vunpack.c.l.b16 %v123
    %v424 = vunpack.c.h.b16 %v123
    %v425 = vunpack.c.l.b16 %v124
    %v426 = vunpack.c.h.b16 %v124
    %v427 = vunpack.c.l.b16 %v125
    %v428 = vunpack.c.h.b16 %v125
    %v429 = vunpack.c.l.b16 %v126
    %v430 = vunpack.c.h.b16 %v126
    %v431 = vunpack.c.l.b16 %v127
    %v432 = vunpack.c.h.b16 %v127
    %v433 = vunpack.c.l.b16 %v128
    %v434 = vunpack.c.h.b16 %v128
    %v435 = vunpack.c.l.b16 %v129
    %v436 = vunpack.c.h.b16 %v129
    %v437 = vunpack.c.l.b16 %v130
    %v438 = vunpack.c.h.b16 %v130
    %v439 = vunpack.c.l.b16 %v131
    %v440 = vunpack.c.h.b16 %v131
    %v441 = vunpack.c.l.b16 %v132
    %v442 = vunpack.c.h.b16 %v132
    %v443 = vunpack.c.l.b16 %v133
    %v444 = vunpack.c.h.b16 %v133
    %v445 = vunpack.c.l.b16 %v134
    %v446 = vunpack.c.h.b16 %v134
    %v447 = vunpack.c.l.b16 %v135
    %v448 = vunpack.c.h.b16 %v135
    %v449 = vunpack.c.l.b16 %v136
    %v450 = vunpack.c.h.b16 %v136
    %v451 = vunpack.c.l.b16 %v137
    %v452 = vunpack.c.h.b16 %v137
    %v453 = vunpack.c.l.b16 %v138
    %v454 = vunpack.c.h.b16 %v138
    %v455 = vunpack.c.l.b16 %v139
    %v456 = vunpack.c.h.b16 %v139
    %v457 = vunpack.c.l.b16 %v140
    %v458 = vunpack.c.h.b16 %v140
    %v459 = vunpack.c.l.b16 %v141
    %v460 = vunpack.c.h.b16 %v141
    %v461 = vunpack.c.l.b16 %v142
    %v462 = vunpack.c.h.b16 %v142
    %v463 = vunpack.c.l.b16 %v143
    %v464 = vunpack.c.h.b16 %v143
    %v465 = vunpack.c.l.b16 %v144
    %v466 = vunpack.c.h.b16 %v144
    %v467 = vunpack.c.l.b16 %v145
    %v468 = vunpack.c.h.b16 %v145
    %v469 = vunpack.c.l.b16 %v146
    %v470 = vunpack.c.h.b16 %v146
    %v471 = vunpack.c.l.b16 %v147
    %v472 = vunpack.c.h.b16 %v147
    %v473 = vunpack.c.l.b16 %v148
    %v474 = vunpack.c.h.b16 %v148
    %v475 = vunpack.c.l.b16 %v149
    %v476 = vunpack.c.h.b16 %v149
    %v477 = vunpack.c.l.b16 %v150
    %v478 = vunpack.c.h.b16 %v150
    %v479 = vunpack.c.l.b16 %v151
    %v480 = vunpack.c.h.b16 %v151
    %v481 = vunpack.c.l.b16 %v152
    %v482 = vunpack.c.h.b16 %v152
    %v483 = vunpack.c.l.b16 %v153
    %v484 = vunpack.c.h.b16 %v153
    %v485 = vunpack.c.l.b16 %v154
    %v486 = vunpack.c.h.b16 %v154
    %v487 = vunpack.c.l.b16 %v155
    %v488 = vunpack.c.h.b16 %v155
    %v489 = vunpack.c.l.b16 %v156
    %v490 = vunpack.c.h.b16 %v156
    %v491 = vunpack.c.l.b16 %v157
    %v492 = vunpack.c.h.b16 %v157
    %v493 = vunpack.c.l.b16 %v158
    %v494 = vunpack.c.h.b16 %v158
    %v495 = vunpack.c.l.b16 %v159
    %v496 = vunpack.c.h.b16 %v159
    %v497 = vunpack.c.l.b16 %v160
    %v498 = vunpack.c.h.b16 %v160
    %v499 = vunpack.c.l.b16 %v161
    %v500 = vunpack.c.h.b16 %v161
    %v501 = vunpack.c.l.b16 %v162
    %v502 = vunpack.c.h.b16 %v162
    %v503 = vunpack.c.l.b16 %v163
    %v504 = vunpack.c.h.b16 %v163
    %v505 = vunpack.c.l.b16 %v164
    %v506 = vunpack.c.h.b16 %v164
    %v507 = vunpack.c.l.b16 %v165
    %v508 = vunpack.c.h.b16 %v165
    %v509 = vunpack.c.l.b16 %v166
    %v510 = vunpack.c.h.b16 %v166
    %v511 = vunpack.c.l.b16 %v167
    %v512 = vunpack.c.h.b16 %v167
    %v513 = vunpack.c.l.b16 %v168
    %v514 = vunpack.c.h.b16 %v168
    %v515 = vunpack.c.l.b16 %v169
    %v516 = vunpack.c.h.b16 %v169
    %v517 = vunpack.c.l.b16 %v170
    %v518 = vunpack.c.h.b16 %v170
    %v519 = vunpack.c.l.b16 %v171
    %v520 = vunpack.c.h.b16 %v171
    %v521 = vunpack.c.l.b16 %v172
    %v522 = vunpack.c.h.b16 %v172
    %v523 = vunpack.c.l.b16 %v173
    %v524 = vunpack.c.h.b16 %v173
    %v525 = vunpack.c.l.b16 %v174
    %v526 = vunpack.c.h.b16 %v174
    %v527 = vunpack.c.l.b16 %v175
    %v528 = vunpack.c.h.b16 %v175
    %v529 = vunpack.c.l.b16 %v176
    %v530 = vunpack.c.h.b16 %v176
    %v531 = vunpack.c.l.b16 %v177
    %v532 = vunpack.c.h.b16 %v177
    %v533 = vunpack.c.l.b16 %v178
    %v534 = vunpack.c.h.b16 %v178
    %v535 = vunpack.c.l.b16 %v179
    %v536 = vunpack.c.h.b16 %v179
    %v537 = vunpack.c.l.b16 %v180
    %v538 = vunpack.c.h.b16 %v180
    %v539 = vunpack.c.l.b16 %v181
    %v540 = vunpack.c.h.b16 %v181
    %v541 = vunpack.c.l.b16 %v182
    %v542 = vunpack.c.h.b16 %v182
    %v543 = vunpack.c.l.b16 %v183
    %v544 = vunpack.c.h.b16 %v183
    %v545 = vunpack.c.l.b16 %v184
    %v546 = vunpack.c.h.b16 %v184
    %v547 = vunpack.c.l.b16 %v185
    %v548 = vunpack.c.h.b16 %v185
    %v549 = vunpack.c.l.b16 %v186
    %v550 = vunpack.c.h.b16 %v186
    %v551 = vunpack.c.l.b16 %v187
    %v552 = vunpack.c.h.b16 %v187
    %v553 = vunpack.c.l.b16 %v188
    %v554 = vunpack.c.h.b16 %v188
    %v555 = vunpack.c.l.b16 %v189
    %v556 = vunpack.c.h.b16 %v189
    %v557 = vunpack.c.l.b16 %v190
    %v558 = vunpack.c.h.b16 %v190
    %v559 = vunpack.c.l.b16 %v191
    %v560 = vunpack.c.h.b16 %v191
    %v561 = vunpack.c.l.b16 %v192
    %v562 = vunpack.c.h.b16 %v192
    %v563 = vunpack.c.l.b16 %v193
    %v564 = vunpack.c.h.b16 %v193
    %v565 = vunpack.c.l.b16 %v194
    %v566 = vunpack.c.h.b16 %v194
    %v567 = vunpack.c.l.b16 %v195
    %v568 = vunpack.c.h.b16 %v195
    %v569 = vunpack.c.l.b16 %v196
    %v570 = vunpack.c.h.b16 %v196
    %v571 = vunpack.c.l.b16 %v197
    %v572 = vunpack.c.h.b16 %v197
    %v573 = vunpack.c.l.b16 %v198
    %v574 = vunpack.c.h.b16 %v198
    %v575 = vunpack.c.l.b16 %v199
    %v576 = vunpack.c.h.b16 %v199
    %v577 = vunpack.c.l.b16 %v200
    %v578 = vunpack.c.h.b16 %v200
    %v579 = vunpack.c.l.b16 %v201
    %v580 = vunpack.c.h.b16 %v201
    %v581 = vunpack.c.l.b16 %v202
    %v582 = vunpack.c.h.b16 %v202
    %v583 = vunpack.c.l.b16 %v203
    %v584 = vunpack.c.h.b16 %v203
    %v585 = vunpack.c.l.b16 %v204
    %v586 = vunpack.c.h.b16 %v204
    %v587 = vunpack.c.l.b16 %v205
    %v588 = vunpack.c.h.b16 %v205
    %v589 = vunpack.c.l.b16 %v206
    %v590 = vunpack.c.h.b16 %v206
    %v591 = vpack.c.b16 %v351, %v335
    %v592 = vpack.c.b16 %v352, %v336
    %v593 = vpack.c.b16 %v353, %v337
    %v594 = vpack.c.b16 %v354, %v338
    %v595 = vpack.c.b16 %v355, %v339
    %v596 = vpack.c.b16 %v356, %v340
    %v597 = vpack.c.b16 %v357, %v341
    %v598 = vpack.c.b16 %v358, %v342
    %v599 = vpack.c.b16 %v359, %v343
    %v600 = vpack.c.b16 %v360, %v344
    %v601 = vpack.c.b16 %v361, %v345
    %v602 = vpack.c.b16 %v362, %v346
    %v603 = vpack.c.b16 %v363, %v347
    %v604 = vpack.c.b16 %v364, %v348
    %v605 = vpack.c.b16 %v365, %v349
    %v606 = vpack.c.b16 %v366, %v350
    %v607 = vpack.c.b16 %v383, %v367
    %v608 = vpack.c.b16 %v384, %v368
    %v609 = vpack.c.b16 %v385, %v369
    %v610 = vpack.c.b16 %v386, %v370
    %v611 = vpack.c.b16 %v387, %v371
    %v612 = vpack.c.b16 %v388, %v372
    %v613 = vpack.c.b16 %v389, %v373
    %v614 = vpack.c.b16 %v390, %v374
    %v615 = vpack.c.b16 %v391, %v375
    %v616 = vpack.c.b16 %v392, %v376
    %v617 = vpack.c.b16 %v393, %v377
    %v618 = vpack.c.b16 %v394, %v378
    %v619 = vpack.c.b16 %v395, %v379
    %v620 = vpack.c.b16 %v396, %v380
    %v621 = vpack.c.b16 %v397, %v381
    %v622 = vpack.c.b16 %v398, %v382
    %v623 = vpack.c.b16 %v415, %v399
    %v624 = vpack.c.b16 %v416, %v400
    %v625 = vpack.c.b16 %v417, %v401
    %v626 = vpack.c.b16 %v418, %v402
    %v627 = vpack.c.b16 %v419, %v403
    %v628 = vpack.c.b16 %v420, %v404
    %v629 = vpack.c.b16 %v421, %v405
    %v630 = vpack.c.b16 %v422, %v406
    %v631 = vpack.c.b16 %v423, %v407
    %v632 = vpack.c.b16 %v424, %v408
    %v633 = vpack.c.b16 %v425, %v409
    %v634 = vpack.c.b16 %v426, %v410
    %v635 = vpack.c.b16 %v427, %v411
    %v636 = vpack.c.b16 %v428, %v412
    %v637 = vpack.c.b16 %v429, %v413
    %v638 = vpack.c.b16 %v430, %v414
    %v639 = vpack.c.b16 %v447, %v431
    %v640 = vpack.c.b16 %v448, %v432
    %v641 = vpack.c.b16 %v449, %v433
    %v642 = vpack.c.b16 %v450, %v434
    %v643 = vpack.c.b16 %v451, %v435
    %v644 = vpack.c.b16 %v452, %v436
    %v645 = vpack.c.b16 %v453, %v437
    %v646 = vpack.c.b16 %v454, %v438
    %v647 = vpack.c.b16 %v455, %v439
    %v648 = vpack.c.b16 %v456, %v440
    %v649 = vpack.c.b16 %v457, %v441
    %v650 = vpack.c.b16 %v458, %v442
    %v651 = vpack.c.b16 %v459, %v443
    %v652 = vpack.c.b16 %v460, %v444
    %v653 = vpack.c.b16 %v461, %v445
    %v654 = vpack.c.b16 %v462, %v446
    %v655 = vpack.c.b16 %v479, %v463
    %v656 = vpack.c.b16 %v480, %v464
    %v657 = vpack.c.b16 %v481, %v465
    %v658 = vpack.c.b16 %v482, %v466
    %v659 = vpack.c.b16 %v483, %v467
    %v660 = vpack.c.b16 %v484, %v468
    %v661 = vpack.c.b16 %v485, %v469
    %v662 = vpack.c.b16 %v486, %v470
    %v663 = vpack.c.b16 %v487, %v471
    %v664 = vpack.c.b16 %v488, %v472
    %v665 = vpack.c.b16 %v489, %v473
    %v666 = vpack.c.b16 %v490, %v474
    %v667 = vpack.c.b16 %v491, %v475
    %v668 = vpack.c.b16 %v492, %v476
    %v669 = vpack.c.b16 %v493, %v477
    %v670 = vpack.c.b16 %v494, %v478
    %v671 = vpack.c.b16 %v511, %v495
    %v672 = vpack.c.b16 %v512, %v496
    %v673 = vpack.c.b16 %v513, %v497
    %v674 = vpack.c.b16 %v514, %v498
    %v675 = vpack.c.b16 %v515, %v499
    %v676 = vpack.c.b16 %v516, %v500
    %v677 = vpack.c.b16 %v517, %v501
    %v678 = vpack.c.b16 %v518, %v502
    %v679 = vpack.c.b16 %v519, %v503
    %v680 = vpack.c.b16 %v520, %v504
    %v681 = vpack.c.b16 %v521, %v505
    %v682 = vpack.c.b16 %v522, %v506
    %v683 = vpack.c.b16 %v523, %v507
    %v684 = vpack.c.b16 %v524, %v508
    %v685 = vpack.c.b16 %v525, %v509
    %v686 = vpack.c.b16 %v526, %v510
    %v687 = vpack.c.b16 %v543, %v527
    %v688 = vpack.c.b16 %v544, %v528
    %v689 = vpack.c.b16 %v545, %v529
    %v690 = vpack.c.b16 %v546, %v530
    %v691 = vpack.c.b16 %v547, %v531
    %v692 = vpack.c.b16 %v548, %v532
    %v693 = vpack.c.b16 %v549, %v533
    %v694 = vpack.c.b16 %v550, %v534
    %v695 = vpack.c.b16 %v551, %v535
    %v696 = vpack.c.b16 %v552, %v536
    %v697 = vpack.c.b16 %v553, %v537
    %v698 = vpack.c.b16 %v554, %v538
    %v699 = vpack.c.b16 %v555, %v539
    %v700 = vpack.c.b16 %v556, %v540
    %v701 = vpack.c.b16 %v557, %v541
    %v702 = vpack.c.b16 %v558, %v542
    %v703 = vpack.c.b16 %v575, %v559
    %v704 = vpack.c.b16 %v576, %v560
    %v705 = vpack.c.b16 %v577, %v561
    %v706 = vpack.c.b16 %v578, %v562
    %v707 = vpack.c.b16 %v579, %v563
    %v708 = vpack.c.b16 %v580, %v564
    %v709 = vpack.c.b16 %v581, %v565
    %v710 = vpack.c.b16 %v582, %v566
    %v711 = vpack.c.b16 %v583, %v567
    %v712 = vpack.c.b16 %v584, %v568
    %v713 = vpack.c.b16 %v585, %v569
    %v714 = vpack.c.b16 %v586, %v570
    %v715 = vpack.c.b16 %v587, %v571
    %v716 = vpack.c.b16 %v588, %v572
    %v717 = vpack.c.b16 %v589, %v573
    %v718 = vpack.c.b16 %v590, %v574
    %847 = vmatprep.subr.bf16.mxu0 %v704
    %848 = vmatpush1.bf16.msra.mxu0 %v703
    %849 = vmatprep.subr.bf16.mxu0 %v688
    %850 = vmatpush1.bf16.msra.mxu0 %v687
    %851 = vmatprep.subr.bf16.mxu0 %v672
    %852 = vmatpush1.bf16.msra.mxu0 %v671
    %853 = vmatprep.subr.bf16.mxu0 %v656
    %854 = vmatpush1.bf16.msra.mxu0 %v655
    %855 = vmatprep.subr.bf16.mxu0 %v640
    %856 = vmatpush1.bf16.msra.mxu0 %v639
    %857 = vmatprep.subr.bf16.mxu0 %v624
    %858 = vmatpush1.bf16.msra.mxu0 %v623
    %859 = vmatprep.subr.bf16.mxu0 %v608
    %860 = vmatpush1.bf16.msra.mxu0 %v607
    %861 = vmatprep.subr.bf16.mxu0 %v592
    %862 = vmatpush1.bf16.msra.mxu0 %v591
    %863 = vmatprep.subr.bf16.mxu0 0
    %864 = vmatpush2.bf16.msra.mxu0 0
    %865 = vmatprep.subr.bf16.mxu0 0
    %866 = vmatpush2.bf16.msra.mxu0 0
    %867 = vmatprep.subr.bf16.mxu0 0
    %868 = vmatpush2.bf16.msra.mxu0 0
    %869 = vmatprep.subr.bf16.mxu0 0
    %870 = vmatpush2.bf16.msra.mxu0 0
    %871 = vmatprep.subr.bf16.mxu0 0
    %872 = vmatpush2.bf16.msra.mxu0 0
    %873 = vmatprep.subr.bf16.mxu0 0
    %874 = vmatpush2.bf16.msra.mxu0 0
    %875 = vmatprep.subr.bf16.mxu0 0
    %876 = vmatpush2.bf16.msra.mxu0 0
    %877 = vmatprep.subr.bf16.mxu0 0
    %878 = vmatpush2.bf16.msra.mxu0 0
    %879 = vmatprep.mubr.bf16.mxu0 0
    %880 = vmatmul.mubr.bf16.gmra.mxu0 %v78
    %v881 = vpop.f32.mrf.mxu0
    %v882 = vadd.f32 0.0, %v881
    %v883 = vpop.f32.mrf.mxu0
    %v884 = vadd.f32 0.0, %v883
    %v885 = vpop.f32.mrf.mxu0
    %v886 = vpop.f32.mrf.mxu0
    %887 = vdwg.mxu0
    %888 = vmatprep.subr.bf16.mxu0 %v706
    %889 = vmatpush1.bf16.msra.mxu0 %v705
    %890 = vmatprep.subr.bf16.mxu0 %v690
    %891 = vmatpush1.bf16.msra.mxu0 %v689
    %892 = vmatprep.subr.bf16.mxu0 %v674
    %893 = vmatpush1.bf16.msra.mxu0 %v673
    %894 = vmatprep.subr.bf16.mxu0 %v658
    %895 = vmatpush1.bf16.msra.mxu0 %v657
    %896 = vmatprep.subr.bf16.mxu0 %v642
    %897 = vmatpush1.bf16.msra.mxu0 %v641
    %898 = vmatprep.subr.bf16.mxu0 %v626
    %899 = vmatpush1.bf16.msra.mxu0 %v625
    %900 = vmatprep.subr.bf16.mxu0 %v610
    %901 = vmatpush1.bf16.msra.mxu0 %v609
    %902 = vmatprep.subr.bf16.mxu0 %v594
    %903 = vmatpush1.bf16.msra.mxu0 %v593
    %904 = vmatprep.subr.bf16.mxu0 0
    %905 = vmatpush2.bf16.msra.mxu0 0
    %906 = vmatprep.subr.bf16.mxu0 0
    %907 = vmatpush2.bf16.msra.mxu0 0
    %908 = vmatprep.subr.bf16.mxu0 0
    %909 = vmatpush2.bf16.msra.mxu0 0
    %910 = vmatprep.subr.bf16.mxu0 0
    %911 = vmatpush2.bf16.msra.mxu0 0
    %912 = vmatprep.subr.bf16.mxu0 0
    %913 = vmatpush2.bf16.msra.mxu0 0
    %914 = vmatprep.subr.bf16.mxu0 0
    %915 = vmatpush2.bf16.msra.mxu0 0
    %916 = vmatprep.subr.bf16.mxu0 0
    %917 = vmatpush2.bf16.msra.mxu0 0
    %918 = vmatprep.subr.bf16.mxu0 0
    %919 = vmatpush2.bf16.msra.mxu0 0
    %920 = vmatprep.mubr.bf16.mxu0 0
    %921 = vmatmul.mubr.bf16.gmra.mxu0 %v78
    %v922 = vpop.f32.mrf.mxu0
    %v923 = vadd.f32 0.0, %v922
    %v924 = vpop.f32.mrf.mxu0
    %v925 = vadd.f32 0.0, %v924
    %v926 = vpop.f32.mrf.mxu0
    %v927 = vpop.f32.mrf.mxu0
    %928 = vdwg.mxu0
    %929 = vmatprep.subr.bf16.mxu0 %v708
    %930 = vmatpush1.bf16.msra.mxu0 %v707
    %931 = vmatprep.subr.bf16.mxu0 %v692
    %932 = vmatpush1.bf16.msra.mxu0 %v691
    %933 = vmatprep.subr.bf16.mxu0 %v676
    %934 = vmatpush1.bf16.msra.mxu0 %v675
    %935 = vmatprep.subr.bf16.mxu0 %v660
    %936 = vmatpush1.bf16.msra.mxu0 %v659
    %937 = vmatprep.subr.bf16.mxu0 %v644
    %938 = vmatpush1.bf16.msra.mxu0 %v643
    %939 = vmatprep.subr.bf16.mxu0 %v628
    %940 = vmatpush1.bf16.msra.mxu0 %v627
    %941 = vmatprep.subr.bf16.mxu0 %v612
    %942 = vmatpush1.bf16.msra.mxu0 %v611
    %943 = vmatprep.subr.bf16.mxu0 %v596
    %944 = vmatpush1.bf16.msra.mxu0 %v595
    %945 = vmatprep.subr.bf16.mxu0 0
    %946 = vmatpush2.bf16.msra.mxu0 0
    %947 = vmatprep.subr.bf16.mxu0 0
    %948 = vmatpush2.bf16.msra.mxu0 0
    %949 = vmatprep.subr.bf16.mxu0 0
    %950 = vmatpush2.bf16.msra.mxu0 0
    %951 = vmatprep.subr.bf16.mxu0 0
    %952 = vmatpush2.bf16.msra.mxu0 0
    %953 = vmatprep.subr.bf16.mxu0 0
    %954 = vmatpush2.bf16.msra.mxu0 0
    %955 = vmatprep.subr.bf16.mxu0 0
    %956 = vmatpush2.bf16.msra.mxu0 0
    %957 = vmatprep.subr.bf16.mxu0 0
    %958 = vmatpush2.bf16.msra.mxu0 0
    %959 = vmatprep.subr.bf16.mxu0 0
    %960 = vmatpush2.bf16.msra.mxu0 0
    %961 = vmatprep.mubr.bf16.mxu0 0
    %962 = vmatmul.mubr.bf16.gmra.mxu0 %v78
    %v963 = vpop.f32.mrf.mxu0
    %v964 = vadd.f32 0.0, %v963
    %v965 = vpop.f32.mrf.mxu0
    %v966 = vadd.f32 0.0, %v965
    %v967 = vpop.f32.mrf.mxu0
    %v968 = vpop.f32.mrf.mxu0
    %969 = vdwg.mxu0
    %970 = vmatprep.subr.bf16.mxu0 %v710
    %971 = vmatpush1.bf16.msra.mxu0 %v709
    %972 = vmatprep.subr.bf16.mxu0 %v694
    %973 = vmatpush1.bf16.msra.mxu0 %v693
    %974 = vmatprep.subr.bf16.mxu0 %v678
    %975 = vmatpush1.bf16.msra.mxu0 %v677
    %976 = vmatprep.subr.bf16.mxu0 %v662
    %977 = vmatpush1.bf16.msra.mxu0 %v661
    %978 = vmatprep.subr.bf16.mxu0 %v646
    %979 = vmatpush1.bf16.msra.mxu0 %v645
    %980 = vmatprep.subr.bf16.mxu0 %v630
    %981 = vmatpush1.bf16.msra.mxu0 %v629
    %982 = vmatprep.subr.bf16.mxu0 %v614
    %983 = vmatpush1.bf16.msra.mxu0 %v613
    %984 = vmatprep.subr.bf16.mxu0 %v598
    %985 = vmatpush1.bf16.msra.mxu0 %v597
    %986 = vmatprep.subr.bf16.mxu0 0
    %987 = vmatpush2.bf16.msra.mxu0 0
    %988 = vmatprep.subr.bf16.mxu0 0
    %989 = vmatpush2.bf16.msra.mxu0 0
    %990 = vmatprep.subr.bf16.mxu0 0
    %991 = vmatpush2.bf16.msra.mxu0 0
    %992 = vmatprep.subr.bf16.mxu0 0
    %993 = vmatpush2.bf16.msra.mxu0 0
    %994 = vmatprep.subr.bf16.mxu0 0
    %995 = vmatpush2.bf16.msra.mxu0 0
    %996 = vmatprep.subr.bf16.mxu0 0
    %997 = vmatpush2.bf16.msra.mxu0 0
    %998 = vmatprep.subr.bf16.mxu0 0
    %999 = vmatpush2.bf16.msra.mxu0 0
    %1000 = vmatprep.subr.bf16.mxu0 0
    %1001 = vmatpush2.bf16.msra.mxu0 0
    %1002 = vmatprep.mubr.bf16.mxu0 0
    %1003 = vmatmul.mubr.bf16.gmra.mxu0 %v78
    %v1004 = vpop.f32.mrf.mxu0
    %v1005 = vadd.f32 0.0, %v1004
    %v1006 = vpop.f32.mrf.mxu0
    %v1007 = vadd.f32 0.0, %v1006
    %v1008 = vpop.f32.mrf.mxu0
    %v1009 = vpop.f32.mrf.mxu0
    %1010 = vdwg.mxu0
    %1011 = vmatprep.subr.bf16.mxu0 %v712
    %1012 = vmatpush1.bf16.msra.mxu0 %v711
    %1013 = vmatprep.subr.bf16.mxu0 %v696
    %1014 = vmatpush1.bf16.msra.mxu0 %v695
    %1015 = vmatprep.subr.bf16.mxu0 %v680
    %1016 = vmatpush1.bf16.msra.mxu0 %v679
    %1017 = vmatprep.subr.bf16.mxu0 %v664
    %1018 = vmatpush1.bf16.msra.mxu0 %v663
    %1019 = vmatprep.subr.bf16.mxu0 %v648
    %1020 = vmatpush1.bf16.msra.mxu0 %v647
    %1021 = vmatprep.subr.bf16.mxu0 %v632
    %1022 = vmatpush1.bf16.msra.mxu0 %v631
    %1023 = vmatprep.subr.bf16.mxu0 %v616
    %1024 = vmatpush1.bf16.msra.mxu0 %v615
    %1025 = vmatprep.subr.bf16.mxu0 %v600
    %1026 = vmatpush1.bf16.msra.mxu0 %v599
    %1027 = vmatprep.subr.bf16.mxu0 0
    %1028 = vmatpush2.bf16.msra.mxu0 0
    %1029 = vmatprep.subr.bf16.mxu0 0
    %1030 = vmatpush2.bf16.msra.mxu0 0
    %1031 = vmatprep.subr.bf16.mxu0 0
    %1032 = vmatpush2.bf16.msra.mxu0 0
    %1033 = vmatprep.subr.bf16.mxu0 0
    %1034 = vmatpush2.bf16.msra.mxu0 0
    %1035 = vmatprep.subr.bf16.mxu0 0
    %1036 = vmatpush2.bf16.msra.mxu0 0
    %1037 = vmatprep.subr.bf16.mxu0 0
    %1038 = vmatpush2.bf16.msra.mxu0 0
    %1039 = vmatprep.subr.bf16.mxu0 0
    %1040 = vmatpush2.bf16.msra.mxu0 0
    %1041 = vmatprep.subr.bf16.mxu0 0
    %1042 = vmatpush2.bf16.msra.mxu0 0
    %1043 = vmatprep.mubr.bf16.mxu0 0
    %1044 = vmatmul.mubr.bf16.gmra.mxu0 %v78
    %v1045 = vpop.f32.mrf.mxu0
    %v1046 = vadd.f32 0.0, %v1045
    %v1047 = vpop.f32.mrf.mxu0
    %v1048 = vadd.f32 0.0, %v1047
    %v1049 = vpop.f32.mrf.mxu0
    %v1050 = vpop.f32.mrf.mxu0
    %1051 = vdwg.mxu0
    %1052 = vmatprep.subr.bf16.mxu0 %v714
    %1053 = vmatpush1.bf16.msra.mxu0 %v713
    %1054 = vmatprep.subr.bf16.mxu0 %v698
    %1055 = vmatpush1.bf16.msra.mxu0 %v697
    %1056 = vmatprep.subr.bf16.mxu0 %v682
    %1057 = vmatpush1.bf16.msra.mxu0 %v681
    %1058 = vmatprep.subr.bf16.mxu0 %v666
    %1059 = vmatpush1.bf16.msra.mxu0 %v665
    %1060 = vmatprep.subr.bf16.mxu0 %v650
    %1061 = vmatpush1.bf16.msra.mxu0 %v649
    %1062 = vmatprep.subr.bf16.mxu0 %v634
    %1063 = vmatpush1.bf16.msra.mxu0 %v633
    %1064 = vmatprep.subr.bf16.mxu0 %v618
    %1065 = vmatpush1.bf16.msra.mxu0 %v617
    %1066 = vmatprep.subr.bf16.mxu0 %v602
    %1067 = vmatpush1.bf16.msra.mxu0 %v601
    %1068 = vmatprep.subr.bf16.mxu0 0
    %1069 = vmatpush2.bf16.msra.mxu0 0
    %1070 = vmatprep.subr.bf16.mxu0 0
    %1071 = vmatpush2.bf16.msra.mxu0 0
    %1072 = vmatprep.subr.bf16.mxu0 0
    %1073 = vmatpush2.bf16.msra.mxu0 0
    %1074 = vmatprep.subr.bf16.mxu0 0
    %1075 = vmatpush2.bf16.msra.mxu0 0
    %1076 = vmatprep.subr.bf16.mxu0 0
    %1077 = vmatpush2.bf16.msra.mxu0 0
    %1078 = vmatprep.subr.bf16.mxu0 0
    %1079 = vmatpush2.bf16.msra.mxu0 0
    %1080 = vmatprep.subr.bf16.mxu0 0
    %1081 = vmatpush2.bf16.msra.mxu0 0
    %1082 = vmatprep.subr.bf16.mxu0 0
    %1083 = vmatpush2.bf16.msra.mxu0 0
    %1084 = vmatprep.mubr.bf16.mxu0 0
    %1085 = vmatmul.mubr.bf16.gmra.mxu0 %v78
    %v1086 = vpop.f32.mrf.mxu0
    %v1087 = vadd.f32 0.0, %v1086
    %v1088 = vpop.f32.mrf.mxu0
    %v1089 = vadd.f32 0.0, %v1088
    %v1090 = vpop.f32.mrf.mxu0
    %v1091 = vpop.f32.mrf.mxu0
    %1092 = vdwg.mxu0
    %1093 = vmatprep.subr.bf16.mxu0 %v716
    %1094 = vmatpush1.bf16.msra.mxu0 %v715
    %1095 = vmatprep.subr.bf16.mxu0 %v700
    %1096 = vmatpush1.bf16.msra.mxu0 %v699
    %1097 = vmatprep.subr.bf16.mxu0 %v684
    %1098 = vmatpush1.bf16.msra.mxu0 %v683
    %1099 = vmatprep.subr.bf16.mxu0 %v668
    %1100 = vmatpush1.bf16.msra.mxu0 %v667
    %1101 = vmatprep.subr.bf16.mxu0 %v652
    %1102 = vmatpush1.bf16.msra.mxu0 %v651
    %1103 = vmatprep.subr.bf16.mxu0 %v636
    %1104 = vmatpush1.bf16.msra.mxu0 %v635
    %1105 = vmatprep.subr.bf16.mxu0 %v620
    %1106 = vmatpush1.bf16.msra.mxu0 %v619
    %1107 = vmatprep.subr.bf16.mxu0 %v604
    %1108 = vmatpush1.bf16.msra.mxu0 %v603
    %1109 = vmatprep.subr.bf16.mxu0 0
    %1110 = vmatpush2.bf16.msra.mxu0 0
    %1111 = vmatprep.subr.bf16.mxu0 0
    %1112 = vmatpush2.bf16.msra.mxu0 0
    %1113 = vmatprep.subr.bf16.mxu0 0
    %1114 = vmatpush2.bf16.msra.mxu0 0
    %1115 = vmatprep.subr.bf16.mxu0 0
    %1116 = vmatpush2.bf16.msra.mxu0 0
    %1117 = vmatprep.subr.bf16.mxu0 0
    %1118 = vmatpush2.bf16.msra.mxu0 0
    %1119 = vmatprep.subr.bf16.mxu0 0
    %1120 = vmatpush2.bf16.msra.mxu0 0
    %1121 = vmatprep.subr.bf16.mxu0 0
    %1122 = vmatpush2.bf16.msra.mxu0 0
    %1123 = vmatprep.subr.bf16.mxu0 0
    %1124 = vmatpush2.bf16.msra.mxu0 0
    %1125 = vmatprep.mubr.bf16.mxu0 0
    %1126 = vmatmul.mubr.bf16.gmra.mxu0 %v78
    %v1127 = vpop.f32.mrf.mxu0
    %v1128 = vadd.f32 0.0, %v1127
    %v1129 = vpop.f32.mrf.mxu0
    %v1130 = vadd.f32 0.0, %v1129
    %v1131 = vpop.f32.mrf.mxu0
    %v1132 = vpop.f32.mrf.mxu0
    %1133 = vdwg.mxu0
    %1134 = vmatprep.subr.bf16.mxu0 %v718
    %1135 = vmatpush1.bf16.msra.mxu0 %v717
    %1136 = vmatprep.subr.bf16.mxu0 %v702
    %1137 = vmatpush1.bf16.msra.mxu0 %v701
    %1138 = vmatprep.subr.bf16.mxu0 %v686
    %1139 = vmatpush1.bf16.msra.mxu0 %v685
    %1140 = vmatprep.subr.bf16.mxu0 %v670
    %1141 = vmatpush1.bf16.msra.mxu0 %v669
    %1142 = vmatprep.subr.bf16.mxu0 %v654
    %1143 = vmatpush1.bf16.msra.mxu0 %v653
    %1144 = vmatprep.subr.bf16.mxu0 %v638
    %1145 = vmatpush1.bf16.msra.mxu0 %v637
    %1146 = vmatprep.subr.bf16.mxu0 %v622
    %1147 = vmatpush1.bf16.msra.mxu0 %v621
    %1148 = vmatprep.subr.bf16.mxu0 %v606
    %1149 = vmatpush1.bf16.msra.mxu0 %v605
    %1150 = vmatprep.subr.bf16.mxu0 0
    %1151 = vmatpush2.bf16.msra.mxu0 0
    %1152 = vmatprep.subr.bf16.mxu0 0
    %1153 = vmatpush2.bf16.msra.mxu0 0
    %1154 = vmatprep.subr.bf16.mxu0 0
    %1155 = vmatpush2.bf16.msra.mxu0 0
    %1156 = vmatprep.subr.bf16.mxu0 0
    %1157 = vmatpush2.bf16.msra.mxu0 0
    %1158 = vmatprep.subr.bf16.mxu0 0
    %1159 = vmatpush2.bf16.msra.mxu0 0
    %1160 = vmatprep.subr.bf16.mxu0 0
    %1161 = vmatpush2.bf16.msra.mxu0 0
    %1162 = vmatprep.subr.bf16.mxu0 0
    %1163 = vmatpush2.bf16.msra.mxu0 0
    %1164 = vmatprep.subr.bf16.mxu0 0
    %1165 = vmatpush2.bf16.msra.mxu0 0
    %1166 = vmatprep.mubr.bf16.mxu0 0
    %1167 = vmatmul.mubr.bf16.gmra.mxu0 %v78
    %v1168 = vpop.f32.mrf.mxu0
    %v1169 = vadd.f32 0.0, %v1168
    %v1170 = vpop.f32.mrf.mxu0
    %v1171 = vadd.f32 0.0, %v1170
    %v1172 = vpop.f32.mrf.mxu0
    %v1173 = vpop.f32.mrf.mxu0
    %1174 = vdwg.mxu0
    %v1175 = vadd.f32 %v62, %v882
    %v1176 = vadd.f32 %v63, %v884
    %v1177 = vadd.f32 %v64, %v923
    %v1178 = vadd.f32 %v65, %v925
    %v1179 = vadd.f32 %v66, %v964
    %v1180 = vadd.f32 %v67, %v966
    %v1181 = vadd.f32 %v68, %v1005
    %v1182 = vadd.f32 %v69, %v1007
    %v1183 = vadd.f32 %v70, %v1046
    %v1184 = vadd.f32 %v71, %v1048
    %v1185 = vadd.f32 %v72, %v1087
    %v1186 = vadd.f32 %v73, %v1089
    %v1187 = vadd.f32 %v74, %v1128
    %v1188 = vadd.f32 %v75, %v1130
    %v1189 = vadd.f32 %v76, %v1169
    %v1190 = vadd.f32 %v77, %v1171
    %1191 = vst [vmem:[#allocation2] sm:$0xff] %v1175
    %1192 = vst [vmem:[#allocation2 + $0x8] sm:$0xff] %v1176
    %1193 = vst [vmem:[#allocation2 + $0x10] sm:$0xff] %v1177
    %1194 = vst [vmem:[#allocation2 + $0x18] sm:$0xff] %v1178
    %1195 = vst [vmem:[#allocation2 + $0x20] sm:$0xff] %v1179
    %1196 = vst [vmem:[#allocation2 + $0x28] sm:$0xff] %v1180
    %1197 = vst [vmem:[#allocation2 + $0x30] sm:$0xff] %v1181
    %1198 = vst [vmem:[#allocation2 + $0x38] sm:$0xff] %v1182
    %1199 = vst [vmem:[#allocation2 + $0x40] sm:$0xff] %v1183
    %1200 = vst [vmem:[#allocation2 + $0x48] sm:$0xff] %v1184
    %1201 = vst [vmem:[#allocation2 + $0x50] sm:$0xff] %v1185
    %1202 = vst [vmem:[#allocation2 + $0x58] sm:$0xff] %v1186
    %1203 = vst [vmem:[#allocation2 + $0x60] sm:$0xff] %v1187
    %1204 = vst [vmem:[#allocation2 + $0x68] sm:$0xff] %v1188
    %1205 = vst [vmem:[#allocation2 + $0x70] sm:$0xff] %v1189
    %1206 = vst [vmem:[#allocation2 + $0x78] sm:$0xff] %v1190
    // Predicated region
    $region22: #{tpu_custom_call.1} parent=1 // pred_check
      %p1207 = pneg %p42
    $region23: #{tpu_custom_call.1} parent=1 // pred_check_branch
      %1209 = sbr.rel (%p1207) target = $region25
    $region24: #{tpu_custom_call.1} parent=1 // pred_region
      %v1210 = vld [vmem:[#allocation2] sm:$0xff]
      %v1211 = vld [vmem:[#allocation2 + $0x8] sm:$0xff]
      %v1212 = vld [vmem:[#allocation2 + $0x10] sm:$0xff]
      %v1213 = vld [vmem:[#allocation2 + $0x18] sm:$0xff]
      %v1214 = vld [vmem:[#allocation2 + $0x20] sm:$0xff]
      %v1215 = vld [vmem:[#allocation2 + $0x28] sm:$0xff]
      %v1216 = vld [vmem:[#allocation2 + $0x30] sm:$0xff]
      %v1217 = vld [vmem:[#allocation2 + $0x38] sm:$0xff]
      %v1218 = vld [vmem:[#allocation2 + $0x40] sm:$0xff]
      %v1219 = vld [vmem:[#allocation2 + $0x48] sm:$0xff]
      %v1220 = vld [vmem:[#allocation2 + $0x50] sm:$0xff]
      %v1221 = vld [vmem:[#allocation2 + $0x58] sm:$0xff]
      %v1222 = vld [vmem:[#allocation2 + $0x60] sm:$0xff]
      %v1223 = vld [vmem:[#allocation2 + $0x68] sm:$0xff]
      %v1224 = vld [vmem:[#allocation2 + $0x70] sm:$0xff]
      %v1225 = vld [vmem:[#allocation2 + $0x78] sm:$0xff]
      %1226 = vst [vmem:[#allocation8] sm:$0xff] %v1210
      %1227 = vst [vmem:[#allocation8 + $0x8] sm:$0xff] %v1211
      %1228 = vst [vmem:[#allocation8 + $0x10] sm:$0xff] %v1212
      %1229 = vst [vmem:[#allocation8 + $0x18] sm:$0xff] %v1213
      %1230 = vst [vmem:[#allocation8 + $0x20] sm:$0xff] %v1214
      %1231 = vst [vmem:[#allocation8 + $0x28] sm:$0xff] %v1215
      %1232 = vst [vmem:[#allocation8 + $0x30] sm:$0xff] %v1216
      %1233 = vst [vmem:[#allocation8 + $0x38] sm:$0xff] %v1217
      %1234 = vst [vmem:[#allocation8 + $0x40] sm:$0xff] %v1218
      %1235 = vst [vmem:[#allocation8 + $0x48] sm:$0xff] %v1219
      %1236 = vst [vmem:[#allocation8 + $0x50] sm:$0xff] %v1220
      %1237 = vst [vmem:[#allocation8 + $0x58] sm:$0xff] %v1221
      %1238 = vst [vmem:[#allocation8 + $0x60] sm:$0xff] %v1222
      %1239 = vst [vmem:[#allocation8 + $0x68] sm:$0xff] %v1223
      %1240 = vst [vmem:[#allocation8 + $0x70] sm:$0xff] %v1224
      %1241 = vst [vmem:[#allocation8 + $0x78] sm:$0xff] %v1225
      %v1242 = vrot.slane %v1210, 4
      %v1243 = vadd.f32 %v1210, %v1242
      %v1244 = vrot.slane %v1243, 2
      %v1245 = vadd.f32 %v1243, %v1244
      %v1246 = vrot.slane %v1245, 1
      %v1247 = vadd.f32 %v1245, %v1246
      %v1248 = vrot.slane %v1211, 4
      %v1249 = vadd.f32 %v1211, %v1248
      %v1250 = vrot.slane %v1249, 2
      %v1251 = vadd.f32 %v1249, %v1250
      %v1252 = vrot.slane %v1251, 1
      %v1253 = vadd.f32 %v1251, %v1252
      %v1254 = vrot.slane %v1212, 4
      %v1255 = vadd.f32 %v1212, %v1254
      %v1256 = vrot.slane %v1255, 2
      %v1257 = vadd.f32 %v1255, %v1256
      %v1258 = vrot.slane %v1257, 1
      %v1259 = vadd.f32 %v1257, %v1258
      %v1260 = vrot.slane %v1213, 4
      %v1261 = vadd.f32 %v1213, %v1260
      %v1262 = vrot.slane %v1261, 2
      %v1263 = vadd.f32 %v1261, %v1262
      %v1264 = vrot.slane %v1263, 1
      %v1265 = vadd.f32 %v1263, %v1264
      %v1266 = vrot.slane %v1214, 4
      %v1267 = vadd.f32 %v1214, %v1266
      %v1268 = vrot.slane %v1267, 2
      %v1269 = vadd.f32 %v1267, %v1268
      %v1270 = vrot.slane %v1269, 1
      %v1271 = vadd.f32 %v1269, %v1270
      %v1272 = vrot.slane %v1215, 4
      %v1273 = vadd.f32 %v1215, %v1272
      %v1274 = vrot.slane %v1273, 2
      %v1275 = vadd.f32 %v1273, %v1274
      %v1276 = vrot.slane %v1275, 1
      %v1277 = vadd.f32 %v1275, %v1276
      %v1278 = vrot.slane %v1216, 4
      %v1279 = vadd.f32 %v1216, %v1278
      %v1280 = vrot.slane %v1279, 2
      %v1281 = vadd.f32 %v1279, %v1280
      %v1282 = vrot.slane %v1281, 1
      %v1283 = vadd.f32 %v1281, %v1282
      %v1284 = vrot.slane %v1217, 4
      %v1285 = vadd.f32 %v1217, %v1284
      %v1286 = vrot.slane %v1285, 2
      %v1287 = vadd.f32 %v1285, %v1286
      %v1288 = vrot.slane %v1287, 1
      %v1289 = vadd.f32 %v1287, %v1288
      %v1290 = vrot.slane %v1218, 4
      %v1291 = vadd.f32 %v1218, %v1290
      %v1292 = vrot.slane %v1291, 2
      %v1293 = vadd.f32 %v1291, %v1292
      %v1294 = vrot.slane %v1293, 1
      %v1295 = vadd.f32 %v1293, %v1294
      %v1296 = vrot.slane %v1219, 4
      %v1297 = vadd.f32 %v1219, %v1296
      %v1298 = vrot.slane %v1297, 2
      %v1299 = vadd.f32 %v1297, %v1298
      %v1300 = vrot.slane %v1299, 1
      %v1301 = vadd.f32 %v1299, %v1300
      %v1302 = vrot.slane %v1220, 4
      %v1303 = vadd.f32 %v1220, %v1302
      %v1304 = vrot.slane %v1303, 2
      %v1305 = vadd.f32 %v1303, %v1304
      %v1306 = vrot.slane %v1305, 1
      %v1307 = vadd.f32 %v1305, %v1306
      %v1308 = vrot.slane %v1221, 4
      %v1309 = vadd.f32 %v1221, %v1308
      %v1310 = vrot.slane %v1309, 2
      %v1311 = vadd.f32 %v1309, %v1310
      %v1312 = vrot.slane %v1311, 1
      %v1313 = vadd.f32 %v1311, %v1312
      %v1314 = vrot.slane %v1222, 4
      %v1315 = vadd.f32 %v1222, %v1314
      %v1316 = vrot.slane %v1315, 2
      %v1317 = vadd.f32 %v1315, %v1316
      %v1318 = vrot.slane %v1317, 1
      %v1319 = vadd.f32 %v1317, %v1318
      %v1320 = vrot.slane %v1223, 4
      %v1321 = vadd.f32 %v1223, %v1320
      %v1322 = vrot.slane %v1321, 2
      %v1323 = vadd.f32 %v1321, %v1322
      %v1324 = vrot.slane %v1323, 1
      %v1325 = vadd.f32 %v1323, %v1324
      %v1326 = vrot.slane %v1224, 4
      %v1327 = vadd.f32 %v1224, %v1326
      %v1328 = vrot.slane %v1327, 2
      %v1329 = vadd.f32 %v1327, %v1328
      %v1330 = vrot.slane %v1329, 1
      %v1331 = vadd.f32 %v1329, %v1330
      %v1332 = vrot.slane %v1225, 4
      %v1333 = vadd.f32 %v1225, %v1332
      %v1334 = vrot.slane %v1333, 2
      %v1335 = vadd.f32 %v1333, %v1334
      %v1336 = vrot.slane %v1335, 1
      %v1337 = vadd.f32 %v1335, %v1336
      %v1338 = vmul.f32 %v1210, %v1210
      %v1339 = vmul.f32 %v1211, %v1211
      %v1340 = vmul.f32 %v1212, %v1212
      %v1341 = vmul.f32 %v1213, %v1213
      %v1342 = vmul.f32 %v1214, %v1214
      %v1343 = vmul.f32 %v1215, %v1215
      %v1344 = vmul.f32 %v1216, %v1216
      %v1345 = vmul.f32 %v1217, %v1217
      %v1346 = vmul.f32 %v1218, %v1218
      %v1347 = vmul.f32 %v1219, %v1219
      %v1348 = vmul.f32 %v1220, %v1220
      %v1349 = vmul.f32 %v1221, %v1221
      %v1350 = vmul.f32 %v1222, %v1222
      %v1351 = vmul.f32 %v1223, %v1223
      %v1352 = vmul.f32 %v1224, %v1224
      %v1353 = vmul.f32 %v1225, %v1225
      %v1354 = vrot.slane %v1338, 4
      %v1355 = vadd.f32 %v1338, %v1354
      %v1356 = vrot.slane %v1355, 2
      %v1357 = vadd.f32 %v1355, %v1356
      %v1358 = vrot.slane %v1357, 1
      %v1359 = vadd.f32 %v1357, %v1358
      %v1360 = vrot.slane %v1339, 4
      %v1361 = vadd.f32 %v1339, %v1360
      %v1362 = vrot.slane %v1361, 2
      %v1363 = vadd.f32 %v1361, %v1362
      %v1364 = vrot.slane %v1363, 1
      %v1365 = vadd.f32 %v1363, %v1364
      %v1366 = vrot.slane %v1340, 4
      %v1367 = vadd.f32 %v1340, %v1366
      %v1368 = vrot.slane %v1367, 2
      %v1369 = vadd.f32 %v1367, %v1368
      %v1370 = vrot.slane %v1369, 1
      %v1371 = vadd.f32 %v1369, %v1370
      %v1372 = vrot.slane %v1341, 4
      %v1373 = vadd.f32 %v1341, %v1372
      %v1374 = vrot.slane %v1373, 2
      %v1375 = vadd.f32 %v1373, %v1374
      %v1376 = vrot.slane %v1375, 1
      %v1377 = vadd.f32 %v1375, %v1376
      %v1378 = vrot.slane %v1342, 4
      %v1379 = vadd.f32 %v1342, %v1378
      %v1380 = vrot.slane %v1379, 2
      %v1381 = vadd.f32 %v1379, %v1380
      %v1382 = vrot.slane %v1381, 1
      %v1383 = vadd.f32 %v1381, %v1382
      %v1384 = vrot.slane %v1343, 4
      %v1385 = vadd.f32 %v1343, %v1384
      %v1386 = vrot.slane %v1385, 2
      %v1387 = vadd.f32 %v1385, %v1386
      %v1388 = vrot.slane %v1387, 1
      %v1389 = vadd.f32 %v1387, %v1388
      %v1390 = vrot.slane %v1344, 4
      %v1391 = vadd.f32 %v1344, %v1390
      %v1392 = vrot.slane %v1391, 2
      %v1393 = vadd.f32 %v1391, %v1392
      %v1394 = vrot.slane %v1393, 1
      %v1395 = vadd.f32 %v1393, %v1394
      %v1396 = vrot.slane %v1345, 4
      %v1397 = vadd.f32 %v1345, %v1396
      %v1398 = vrot.slane %v1397, 2
      %v1399 = vadd.f32 %v1397, %v1398
      %v1400 = vrot.slane %v1399, 1
      %v1401 = vadd.f32 %v1399, %v1400
      %v1402 = vrot.slane %v1346, 4
      %v1403 = vadd.f32 %v1346, %v1402
      %v1404 = vrot.slane %v1403, 2
      %v1405 = vadd.f32 %v1403, %v1404
      %v1406 = vrot.slane %v1405, 1
      %v1407 = vadd.f32 %v1405, %v1406
      %v1408 = vrot.slane %v1347, 4
      %v1409 = vadd.f32 %v1347, %v1408
      %v1410 = vrot.slane %v1409, 2
      %v1411 = vadd.f32 %v1409, %v1410
      %v1412 = vrot.slane %v1411, 1
      %v1413 = vadd.f32 %v1411, %v1412
      %v1414 = vrot.slane %v1348, 4
      %v1415 = vadd.f32 %v1348, %v1414
      %v1416 = vrot.slane %v1415, 2
      %v1417 = vadd.f32 %v1415, %v1416
      %v1418 = vrot.slane %v1417, 1
      %v1419 = vadd.f32 %v1417, %v1418
      %v1420 = vrot.slane %v1349, 4
      %v1421 = vadd.f32 %v1349, %v1420
      %v1422 = vrot.slane %v1421, 2
      %v1423 = vadd.f32 %v1421, %v1422
      %v1424 = vrot.slane %v1423, 1
      %v1425 = vadd.f32 %v1423, %v1424
      %v1426 = vrot.slane %v1350, 4
      %v1427 = vadd.f32 %v1350, %v1426
      %v1428 = vrot.slane %v1427, 2
      %v1429 = vadd.f32 %v1427, %v1428
      %v1430 = vrot.slane %v1429, 1
      %v1431 = vadd.f32 %v1429, %v1430
      %v1432 = vrot.slane %v1351, 4
      %v1433 = vadd.f32 %v1351, %v1432
      %v1434 = vrot.slane %v1433, 2
      %v1435 = vadd.f32 %v1433, %v1434
      %v1436 = vrot.slane %v1435, 1
      %v1437 = vadd.f32 %v1435, %v1436
      %v1438 = vrot.slane %v1352, 4
      %v1439 = vadd.f32 %v1352, %v1438
      %v1440 = vrot.slane %v1439, 2
      %v1441 = vadd.f32 %v1439, %v1440
      %v1442 = vrot.slane %v1441, 1
      %v1443 = vadd.f32 %v1441, %v1442
      %v1444 = vrot.slane %v1353, 4
      %v1445 = vadd.f32 %v1353, %v1444
      %v1446 = vrot.slane %v1445, 2
      %v1447 = vadd.f32 %v1445, %v1446
      %v1448 = vrot.slane %v1447, 1
      %v1449 = vadd.f32 %v1447, %v1448
      %vm1450 = vcmask 1040384
      %v1451 = vsel %vm1450, %v1247, %v1359
      %v1452 = vsel %vm1450, %v1253, %v1365
      %v1453 = vsel %vm1450, %v1259, %v1371
      %v1454 = vsel %vm1450, %v1265, %v1377
      %v1455 = vsel %vm1450, %v1271, %v1383
      %v1456 = vsel %vm1450, %v1277, %v1389
      %v1457 = vsel %vm1450, %v1283, %v1395
      %v1458 = vsel %vm1450, %v1289, %v1401
      %v1459 = vsel %vm1450, %v1295, %v1407
      %v1460 = vsel %vm1450, %v1301, %v1413
      %v1461 = vsel %vm1450, %v1307, %v1419
      %v1462 = vsel %vm1450, %v1313, %v1425
      %v1463 = vsel %vm1450, %v1319, %v1431
      %v1464 = vsel %vm1450, %v1325, %v1437
      %v1465 = vsel %vm1450, %v1331, %v1443
      %v1466 = vsel %vm1450, %v1337, %v1449
      %v1483 = vcombine.low %v1451, %v1452
      %v1484 = vcombine.low %v1453, %v1454
      %v1486 = vunpack.c.l.s4 1983009808
      %v1487 = vunpack.c.0.s8 %v1486
      %v1488 = vlaneseq
      %v1489 = vshrl.u32 %v1488, 7
      %v1490 = vsub.s32 %v1487, %v1489
      %v1491 = vrot.slane %v1483, %v1490
      %v1493 = vunpack.c.l.s4 1983009808
      %v1494 = vunpack.c.0.s8 %v1493
      %v1495 = vlaneseq
      %v1496 = vshrl.u32 %v1495, 7
      %v1497 = vsub.s32 %v1494, %v1496
      %v1498 = vrot.slane %v1484, %v1497
      %v1499 = vcombine.low %v1491, %v1498
      %v1500 = vcombine.low %v1455, %v1456
      %v1501 = vcombine.low %v1457, %v1458
      %v1503 = vunpack.c.l.s4 1983009808
      %v1504 = vunpack.c.0.s8 %v1503
      %v1505 = vlaneseq
      %v1506 = vshrl.u32 %v1505, 7
      %v1507 = vsub.s32 %v1504, %v1506
      %v1508 = vrot.slane %v1500, %v1507
      %v1510 = vunpack.c.l.s4 1983009808
      %v1511 = vunpack.c.0.s8 %v1510
      %v1512 = vlaneseq
      %v1513 = vshrl.u32 %v1512, 7
      %v1514 = vsub.s32 %v1511, %v1513
      %v1515 = vrot.slane %v1501, %v1514
      %v1516 = vcombine.low %v1508, %v1515
      %v1517 = vcombine.low %v1459, %v1460
      %v1518 = vcombine.low %v1461, %v1462
      %v1520 = vunpack.c.l.s4 1983009808
      %v1521 = vunpack.c.0.s8 %v1520
      %v1522 = vlaneseq
      %v1523 = vshrl.u32 %v1522, 7
      %v1524 = vsub.s32 %v1521, %v1523
      %v1525 = vrot.slane %v1517, %v1524
      %v1527 = vunpack.c.l.s4 1983009808
      %v1528 = vunpack.c.0.s8 %v1527
      %v1529 = vlaneseq
      %v1530 = vshrl.u32 %v1529, 7
      %v1531 = vsub.s32 %v1528, %v1530
      %v1532 = vrot.slane %v1518, %v1531
      %v1533 = vcombine.low %v1525, %v1532
      %v1534 = vcombine.low %v1463, %v1464
      %v1535 = vcombine.low %v1465, %v1466
      %v1537 = vunpack.c.l.s4 1983009808
      %v1538 = vunpack.c.0.s8 %v1537
      %v1539 = vlaneseq
      %v1540 = vshrl.u32 %v1539, 7
      %v1541 = vsub.s32 %v1538, %v1540
      %v1542 = vrot.slane %v1534, %v1541
      %v1544 = vunpack.c.l.s4 1983009808
      %v1545 = vunpack.c.0.s8 %v1544
      %v1546 = vlaneseq
      %v1547 = vshrl.u32 %v1546, 7
      %v1548 = vsub.s32 %v1545, %v1547
      %v1549 = vrot.slane %v1535, %v1548
      %v1550 = vcombine.low %v1542, %v1549
      %1555 = vst [vmem:[#allocation9] sm:$0xff] %v1499
      %1556 = vst [vmem:[#allocation9 + $0x8] sm:$0xff] %v1516
      %1557 = vst [vmem:[#allocation9 + $0x10] sm:$0xff] %v1533
      %1558 = vst [vmem:[#allocation9 + $0x18] sm:$0xff] %v1550
    $region25: #{tpu_custom_call.1} parent=1 // pred_fallthru
      _
    // Predicated region
    $region26: #{tpu_custom_call.1} parent=1 // pred_check
      _
    $region27: #{tpu_custom_call.1} parent=1 // pred_check_branch
      %1560 = sbr.rel (0) target = $region29
    $region28: #{tpu_custom_call.1} parent=1 // pred_region
      %s1562 = ssub.s32 2048, 2048
      %1563 = vsyncadd [#allocation5], %s1562
      %s1565 = sshll.u32 [#allocation8], 4
      %s1566 = int_to_ptr.vmem [resolvable:$true] %s1565
      %1568 = dma.vmem_to_hbm [thread:$0]  %s1566, 2048, %s2, [#allocation5]
    $region29: #{tpu_custom_call.1} parent=1 // pred_fallthru
      _
    // Predicated region
    $region30: #{tpu_custom_call.1} parent=1 // pred_check
      _
    $region31: #{tpu_custom_call.1} parent=1 // pred_check_branch
      %1570 = sbr.rel (0) target = $region33
    $region32: #{tpu_custom_call.1} parent=1 // pred_region
      %s1572 = ssub.s32 512, 512
      %1573 = vsyncadd [#allocation10], %s1572
      %s1575 = sshll.u32 [#allocation9], 4
      %s1576 = int_to_ptr.vmem [resolvable:$true] %s1575
      %1578 = dma.vmem_to_hbm [thread:$0]  %s1576, 512, %s3, [#allocation10]
    $region33: #{tpu_custom_call.1} parent=1 // pred_fallthru
      _
    // Predicated region
    $region34: #{tpu_custom_call.1} parent=1 // pred_check
      _
    $region35: #{tpu_custom_call.1} parent=1 // pred_check_branch
      %1580 = sbr.rel (0) target = $region37
    $region36: #{tpu_custom_call.1} parent=1 // pred_region
      %1581 = dma.done [#allocation5], 2048
    $region37: #{tpu_custom_call.1} parent=1 // pred_fallthru
      _
    // Predicated region
    $region38: #{tpu_custom_call.1} parent=1 // pred_check
      _
    $region39: #{tpu_custom_call.1} parent=1 // pred_check_branch
      %1583 = sbr.rel (0) target = $region41
    $region40: #{tpu_custom_call.1} parent=1 // pred_region
      %1584 = dma.done [#allocation10], 512
    $region41: #{tpu_custom_call.1} parent=1 // pred_fallthru
      _
    %1585 = vsyncpa [#allocation4], 1
    %1586 = vsyncpa [#allocation7], 1
    %1587 = vsyncpa [#allocation5], 1
    %1588 = vsyncpa [#allocation10], 1

</llo_original>
